<compile_context>
chip_gen: v6e
topology: v6e:2x2x1
jax: 0.10.0
libtpu: 0.0.40
codegen_flags: <defaults>
</compile_context>

<pallas_src>
import jax
import jax.numpy as jnp
from jax import lax
from jax.experimental import pallas as pl
from jax.experimental.pallas import tpu as pltpu


def bilstm_attn_kernel(ids_ref,       # (B*L,) int32  SMEM   token ids, ids[b*L + t]
                       tproj_ref,     # (V, 1, 8H) f32 VMEM  pre-projected embedding
                       whh_f_ref,     # (H, 4H)
                       whh_b_ref,     # (H, 4H)
                       w_attn_ref,    # (1, 2H)
                       w_fc_ref,      # (2H, O)
                       b_fc_ref,      # (1, O)
                       out_ref,       # (Bp, O)
                       gx_ref):       # scratch (L*Bp, 8H) gathered input-gate slab
    Bp, O = out_ref.shape
    L = gx_ref.shape[0] // Bp
    B = ids_ref.shape[0] // L
    H = whh_f_ref.shape[0]
    G4, G8 = 4 * H, 8 * H

    # ---- in-kernel gather of the pre-projected embedding rows -----------------
    # (replaces the wrapper's gather/transpose/pad chain and the old prologue
    #  (L*Bp, E) @ (E, 8H) matmul; pad-batch rows stay at zero gates)
    gx_ref[...] = jnp.zeros_like(gx_ref)
    for b in range(B):
        for t in range(L):
            tok = ids_ref[b * L + t]
            gx_ref[pl.ds(t * Bp + b, 1), :] = tproj_ref[tok]        # (1, 8H) row

    # recurrent weights loaded once (the loop below is fully unrolled)
    whh_f = whh_f_ref[...]
    whh_b = whh_b_ref[...]

    # lane mask selecting the "g" gate block; PyTorch gate order is [i | f | g | o]
    lane = lax.broadcasted_iota(jnp.int32, (Bp, G4), 1)
    g_mask = (lane >= 2 * H) & (lane < 3 * H)

    def lstm_cell(gates, c):
        # full-vreg activations: 1 sigmoid + 1 tanh over the whole (Bp, 4H) tile,
        # g-lanes picked with the precomputed mask (3 EUP pushes/cell, not 5).
        act = jnp.where(g_mask, jnp.tanh(gates), jax.nn.sigmoid(gates))
        i_g = act[:, 0:H]
        f_g = act[:, H:2 * H]
        g_g = act[:, 2 * H:3 * H]
        o_g = act[:, 3 * H:4 * H]
        c_new = f_g * c + i_g * g_g
        h_new = o_g * jnp.tanh(c_new)
        return h_new, c_new

    zeros = jnp.zeros((Bp, H), jnp.float32)
    h_f, c_f, h_b, c_b = zeros, zeros, zeros, zeros
    hs_f = [None] * L
    hs_b = [None] * L

    # Fully unrolled interleaved fwd/bwd recurrence (L small & static): the two
    # independent dependence chains overlap on MXU/EUP/VPU; 4H = 128 so every gx
    # read is a full-lane, tile-aligned slice.
    # TODO(synk): if the bundle dump shows Whh re-pushed to the MXU every step,
    # switch to pltpu.matmul_push_rhs / matmul_acc_lhs / matmul_pop (one staged
    # RHS per direction; MRB in-place accumulation of gx on v7x).
    for idx in range(L):
        t_f = idx
        t_b = L - 1 - idx
        gates_f = (gx_ref[t_f * Bp:(t_f + 1) * Bp, 0:G4]
                   + jnp.dot(h_f, whh_f, preferred_element_type=jnp.float32))
        gates_b = (gx_ref[t_b * Bp:(t_b + 1) * Bp, G4:G8]
                   + jnp.dot(h_b, whh_b, preferred_element_type=jnp.float32))
        h_f, c_f = lstm_cell(gates_f, c_f)
        h_b, c_b = lstm_cell(gates_b, c_b)
        hs_f[t_f] = h_f
        hs_b[t_b] = h_b

    # ---- attention + fc epilogue: register-resident, batch kept on sublanes ----
    # (b_attn omitted: adding a constant before softmax is a no-op.)
    w_attn = w_attn_ref[...]                                         # (1, 2H)
    hcat = [jnp.concatenate([hs_f[t], hs_b[t]], axis=-1)             # (Bp, 2H)
            for t in range(L)]
    scores = [jnp.sum(hcat[t] * w_attn, axis=-1, keepdims=True)      # (Bp, 1)
              for t in range(L)]
    m = scores[0]
    for t in range(1, L):
        m = jnp.maximum(m, scores[t])
    es = [jnp.exp(scores[t] - m) for t in range(L)]
    denom = es[0]
    for t in range(1, L):
        denom = denom + es[t]
    ctx = es[0] * hcat[0]
    for t in range(1, L):
        ctx = ctx + es[t] * hcat[t]
    ctx = ctx / denom                                                # (Bp, 2H)

    out_ref[...] = (jnp.dot(ctx, w_fc_ref[...],
                            preferred_element_type=jnp.float32)
                    + b_fc_ref[...])                                 # (Bp, O)


def prepare_params(params):
    """One-time parameter preprocessing (hoisted out of the per-call path)."""
    wih_cat = jnp.concatenate([params['wih_f'], params['wih_b']], axis=1)   # (E, 8H)
    b_cat = jnp.concatenate([params['b_f'], params['b_b']], axis=1)         # (1, 8H)
    # Fold the time-invariant input projection (both directions, biases included)
    # into the embedding table: one row per token = its full pre-activation gates.
    table_proj = params['embedding'] @ wih_cat + b_cat                      # (V, 8H)
    V, G8 = table_proj.shape
    return {
        # leading vocab axis (not the sublane axis) -> cheap dynamic row gather
        'table_proj': table_proj.reshape(V, 1, G8),
        'whh_f': params['whh_f'], 'whh_b': params['whh_b'],
        'w_attn': params['w_attn'],
        'w_fc': params['w_fc'], 'b_fc': params['b_fc'],
    }


@jax.jit
def bilstm_attention_forward(x, prepped):
    """x: (B, L) int32 token ids. Returns (B, output_dim) f32 logits."""
    B, L = x.shape
    H = prepped['whh_f'].shape[0]
    O = prepped['w_fc'].shape[1]
    Bp = ((B + 7) // 8) * 8                       # pad batch to f32 sublane minimum
    ids = x.reshape(B * L).astype(jnp.int32)      # ids[b*L + t]

    vmem = pl.BlockSpec(memory_space=pltpu.MemorySpace.VMEM)
    smem = pl.BlockSpec(memory_space=pltpu.MemorySpace.SMEM)
    out = pl.pallas_call(
        bilstm_attn_kernel,
        out_shape=jax.ShapeDtypeStruct((Bp, O), jnp.float32),
        in_specs=[smem, vmem, vmem, vmem, vmem, vmem, vmem],
        out_specs=vmem,
        scratch_shapes=[pltpu.VMEM((L * Bp, 8 * H), jnp.float32)],  # gathered gates
    )(ids, prepped['table_proj'], prepped['whh_f'], prepped['whh_b'],
      prepped['w_attn'], prepped['w_fc'], prepped['b_fc'])
    # TODO(synk): at production L/B, replace the Python unroll with
    # lax.fori_loop(unroll=k) / an L grid axis, stream gx blocks via BlockSpecs
    # sized for v7x's 64 MiB VMEM, and add a "parallel" batch grid axis so the
    # second v7x TensorCore is used.
    return out[:B]


def reference_forward(x, p):
    """Pure-JAX reference replicating the PyTorch forward semantics."""
    emb = p['embedding'][x]                                          # (B, L, E)
    B, L, _ = emb.shape
    H = p['whh_f'].shape[0]

    def run(seq, wih, whh, b):                                       # seq: (L, B, E)
        def step(carry, x_t):
            h, c = carry
            g = x_t @ wih + h @ whh + b
            i = jax.nn.sigmoid(g[:, :H])
            f = jax.nn.sigmoid(g[:, H:2 * H])
            gg = jnp.tanh(g[:, 2 * H:3 * H])
            o = jax.nn.sigmoid(g[:, 3 * H:])
            c = f * c + i * gg
            h = o * jnp.tanh(c)
            return (h, c), h
        _, hs = lax.scan(step, (jnp.zeros((B, H)), jnp.zeros((B, H))), seq)
        return hs                                                    # (L, B, H)

    seq = jnp.transpose(emb, (1, 0, 2))
    hf = run(seq, p['wih_f'], p['whh_f'], p['b_f'])
    hb = run(seq[::-1], p['wih_b'], p['whh_b'], p['b_b'])[::-1]
    lstm_out = jnp.concatenate([hf, hb], axis=-1)                    # (L, B, 2H)
    scores = jnp.einsum('lbh,h->lb', lstm_out, p['w_attn'][0]) + p['b_attn'][0, 0]
    attn = jax.nn.softmax(scores, axis=0)
    ctx = jnp.sum(attn[:, :, None] * lstm_out, axis=0)               # (B, 2H)
    return ctx @ p['w_fc'] + p['b_fc']


if __name__ == "__main__":
    # module hyper-params: vocab_size, embed_dim, hidden_dim, output_dim
    V, E, H, O = 50, 32, 32, 4
    B, L = 2, 8

    key = jax.random.PRNGKey(0)
    ks = jax.random.split(key, 12)
    s = 0.1

    params = {
        'embedding': jax.random.normal(ks[0], (V, E), jnp.float32) * s,
        # forward direction (weights pre-transposed to (in, 4H); bias = b_ih + b_hh)
        'wih_f': jax.random.normal(ks[1], (E, 4 * H), jnp.float32) * s,
        'whh_f': jax.random.normal(ks[2], (H, 4 * H), jnp.float32) * s,
        'b_f':   jax.random.normal(ks[3], (1, 4 * H), jnp.float32) * s,
        # reverse direction
        'wih_b': jax.random.normal(ks[4], (E, 4 * H), jnp.float32) * s,
        'whh_b': jax.random.normal(ks[5], (H, 4 * H), jnp.float32) * s,
        'b_b':   jax.random.normal(ks[6], (1, 4 * H), jnp.float32) * s,
        # attention: Linear(2H -> 1)
        'w_attn': jax.random.normal(ks[7], (1, 2 * H), jnp.float32) * s,
        'b_attn': jax.random.normal(ks[8], (1, 1), jnp.float32) * s,
        # fc: Linear(2H -> O)
        'w_fc':  jax.random.normal(ks[9], (2 * H, O), jnp.float32) * s,
        'b_fc':  jax.random.normal(ks[10], (1, O), jnp.float32) * s,
    }
    # nn.Embedding(padding_idx=vocab['<pad>']) -> row 0 zeroed at init
    params['embedding'] = params['embedding'].at[0].set(0.0)

    x = jax.random.randint(ks[11], (B, L), 0, V).astype(jnp.int32)
    x = x.at[0, -2:].set(0)   # include some <pad> tokens

    prepped = prepare_params(params)
    out = bilstm_attention_forward(x, prepped)
    jax.block_until_ready(out)

    ref = reference_forward(x, params)
    assert out.shape == (B, O)
    assert jnp.allclose(out, ref, atol=1e-4, rtol=1e-4), (out, ref)
    print("KERNEL_OK")
</pallas_src>

<mosaic_0001>
module attributes {stable_mosaic.version = 11 : i64} {
  func.func @bilstm_attn_kernel(%arg0: memref<16xi32, #tpu.memory_space<smem>>, %arg1: memref<50x1x256xf32, #tpu.memory_space<vmem>>, %arg2: memref<32x128xf32, #tpu.memory_space<vmem>>, %arg3: memref<32x128xf32, #tpu.memory_space<vmem>>, %arg4: memref<1x64xf32, #tpu.memory_space<vmem>>, %arg5: memref<64x4xf32, #tpu.memory_space<vmem>>, %arg6: memref<1x4xf32, #tpu.memory_space<vmem>>, %arg7: memref<8x4xf32, #tpu.memory_space<vmem>>, %arg8: memref<64x256xf32, #tpu.memory_space<vmem>>) attributes {dimension_semantics = [], scalar_prefetch = 0 : i64, scratch_operands = 1 : i64, tpu.core_type = #tpu.core_type<tc>} {
    %cst = arith.constant 0.000000e+00 : f32
    %0 = vector.broadcast %cst : f32 to vector<64x256xf32>
    %c0 = arith.constant 0 : index
    %c0_0 = arith.constant 0 : index
    %1 = vector.load %arg8[%c0, %c0_0] : memref<64x256xf32, #tpu.memory_space<vmem>>, vector<64x256xf32>
    tpu.vector_store %arg8[%c0, %c0_0], %0 {strides = array<i32>} : memref<64x256xf32, #tpu.memory_space<vmem>>, vector<64x256xf32>,
    %c0_1 = arith.constant 0 : index
    %2 = memref.load %arg0[%c0_1] : memref<16xi32, #tpu.memory_space<smem>>
    %3 = arith.index_cast %2 : i32 to index
    %c0_2 = arith.constant 0 : index
    %c0_3 = arith.constant 0 : index
    %4 = vector.load %arg1[%3, %c0_2, %c0_3] : memref<50x1x256xf32, #tpu.memory_space<vmem>>, vector<1x1x256xf32>
    %5 = vector.shape_cast %4 : vector<1x1x256xf32> to vector<1x256xf32>
    %c0_4 = arith.constant 0 : index
    %c0_5 = arith.constant 0 : index
    %6 = vector.load %arg8[%c0_4, %c0_5] : memref<64x256xf32, #tpu.memory_space<vmem>>, vector<1x256xf32>
    tpu.vector_store %arg8[%c0_4, %c0_5], %5 {strides = array<i32>} : memref<64x256xf32, #tpu.memory_space<vmem>>, vector<1x256xf32>,
    %c1 = arith.constant 1 : index
    %7 = memref.load %arg0[%c1] : memref<16xi32, #tpu.memory_space<smem>>
    %8 = arith.index_cast %7 : i32 to index
    %c0_6 = arith.constant 0 : index
    %c0_7 = arith.constant 0 : index
    %9 = vector.load %arg1[%8, %c0_6, %c0_7] : memref<50x1x256xf32, #tpu.memory_space<vmem>>, vector<1x1x256xf32>
    %10 = vector.shape_cast %9 : vector<1x1x256xf32> to vector<1x256xf32>
    %c8 = arith.constant 8 : index
    %c0_8 = arith.constant 0 : index
    %11 = vector.load %arg8[%c8, %c0_8] : memref<64x256xf32, #tpu.memory_space<vmem>>, vector<1x256xf32>
    tpu.vector_store %arg8[%c8, %c0_8], %10 {strides = array<i32>} : memref<64x256xf32, #tpu.memory_space<vmem>>, vector<1x256xf32>,
    %c2 = arith.constant 2 : index
    %12 = memref.load %arg0[%c2] : memref<16xi32, #tpu.memory_space<smem>>
    %13 = arith.index_cast %12 : i32 to index
    %c0_9 = arith.constant 0 : index
    %c0_10 = arith.constant 0 : index
    %14 = vector.load %arg1[%13, %c0_9, %c0_10] : memref<50x1x256xf32, #tpu.memory_space<vmem>>, vector<1x1x256xf32>
    %15 = vector.shape_cast %14 : vector<1x1x256xf32> to vector<1x256xf32>
    %c16 = arith.constant 16 : index
    %c0_11 = arith.constant 0 : index
    %16 = vector.load %arg8[%c16, %c0_11] : memref<64x256xf32, #tpu.memory_space<vmem>>, vector<1x256xf32>
    tpu.vector_store %arg8[%c16, %c0_11], %15 {strides = array<i32>} : memref<64x256xf32, #tpu.memory_space<vmem>>, vector<1x256xf32>,
    %c3 = arith.constant 3 : index
    %17 = memref.load %arg0[%c3] : memref<16xi32, #tpu.memory_space<smem>>
    %18 = arith.index_cast %17 : i32 to index
    %c0_12 = arith.constant 0 : index
    %c0_13 = arith.constant 0 : index
    %19 = vector.load %arg1[%18, %c0_12, %c0_13] : memref<50x1x256xf32, #tpu.memory_space<vmem>>, vector<1x1x256xf32>
    %20 = vector.shape_cast %19 : vector<1x1x256xf32> to vector<1x256xf32>
    %c24 = arith.constant 24 : index
    %c0_14 = arith.constant 0 : index
    %21 = vector.load %arg8[%c24, %c0_14] : memref<64x256xf32, #tpu.memory_space<vmem>>, vector<1x256xf32>
    tpu.vector_store %arg8[%c24, %c0_14], %20 {strides = array<i32>} : memref<64x256xf32, #tpu.memory_space<vmem>>, vector<1x256xf32>,
    %c4 = arith.constant 4 : index
    %22 = memref.load %arg0[%c4] : memref<16xi32, #tpu.memory_space<smem>>
    %23 = arith.index_cast %22 : i32 to index
    %c0_15 = arith.constant 0 : index
    %c0_16 = arith.constant 0 : index
    %24 = vector.load %arg1[%23, %c0_15, %c0_16] : memref<50x1x256xf32, #tpu.memory_space<vmem>>, vector<1x1x256xf32>
    %25 = vector.shape_cast %24 : vector<1x1x256xf32> to vector<1x256xf32>
    %c32 = arith.constant 32 : index
    %c0_17 = arith.constant 0 : index
    %26 = vector.load %arg8[%c32, %c0_17] : memref<64x256xf32, #tpu.memory_space<vmem>>, vector<1x256xf32>
    tpu.vector_store %arg8[%c32, %c0_17], %25 {strides = array<i32>} : memref<64x256xf32, #tpu.memory_space<vmem>>, vector<1x256xf32>,
    %c5 = arith.constant 5 : index
    %27 = memref.load %arg0[%c5] : memref<16xi32, #tpu.memory_space<smem>>
    %28 = arith.index_cast %27 : i32 to index
    %c0_18 = arith.constant 0 : index
    %c0_19 = arith.constant 0 : index
    %29 = vector.load %arg1[%28, %c0_18, %c0_19] : memref<50x1x256xf32, #tpu.memory_space<vmem>>, vector<1x1x256xf32>
    %30 = vector.shape_cast %29 : vector<1x1x256xf32> to vector<1x256xf32>
    %c40 = arith.constant 40 : index
    %c0_20 = arith.constant 0 : index
    %31 = vector.load %arg8[%c40, %c0_20] : memref<64x256xf32, #tpu.memory_space<vmem>>, vector<1x256xf32>
    tpu.vector_store %arg8[%c40, %c0_20], %30 {strides = array<i32>} : memref<64x256xf32, #tpu.memory_space<vmem>>, vector<1x256xf32>,
    %c6 = arith.constant 6 : index
    %32 = memref.load %arg0[%c6] : memref<16xi32, #tpu.memory_space<smem>>
    %33 = arith.index_cast %32 : i32 to index
    %c0_21 = arith.constant 0 : index
    %c0_22 = arith.constant 0 : index
    %34 = vector.load %arg1[%33, %c0_21, %c0_22] : memref<50x1x256xf32, #tpu.memory_space<vmem>>, vector<1x1x256xf32>
    %35 = vector.shape_cast %34 : vector<1x1x256xf32> to vector<1x256xf32>
    %c48 = arith.constant 48 : index
    %c0_23 = arith.constant 0 : index
    %36 = vector.load %arg8[%c48, %c0_23] : memref<64x256xf32, #tpu.memory_space<vmem>>, vector<1x256xf32>
    tpu.vector_store %arg8[%c48, %c0_23], %35 {strides = array<i32>} : memref<64x256xf32, #tpu.memory_space<vmem>>, vector<1x256xf32>,
    %c7 = arith.constant 7 : index
    %37 = memref.load %arg0[%c7] : memref<16xi32, #tpu.memory_space<smem>>
    %38 = arith.index_cast %37 : i32 to index
    %c0_24 = arith.constant 0 : index
    %c0_25 = arith.constant 0 : index
    %39 = vector.load %arg1[%38, %c0_24, %c0_25] : memref<50x1x256xf32, #tpu.memory_space<vmem>>, vector<1x1x256xf32>
    %40 = vector.shape_cast %39 : vector<1x1x256xf32> to vector<1x256xf32>
    %c56 = arith.constant 56 : index
    %c0_26 = arith.constant 0 : index
    %41 = vector.load %arg8[%c56, %c0_26] : memref<64x256xf32, #tpu.memory_space<vmem>>, vector<1x256xf32>
    tpu.vector_store %arg8[%c56, %c0_26], %40 {strides = array<i32>} : memref<64x256xf32, #tpu.memory_space<vmem>>, vector<1x256xf32>,
    %c8_27 = arith.constant 8 : index
    %42 = memref.load %arg0[%c8_27] : memref<16xi32, #tpu.memory_space<smem>>
    %43 = arith.index_cast %42 : i32 to index
    %c0_28 = arith.constant 0 : index
    %c0_29 = arith.constant 0 : index
    %44 = vector.load %arg1[%43, %c0_28, %c0_29] : memref<50x1x256xf32, #tpu.memory_space<vmem>>, vector<1x1x256xf32>
    %45 = vector.shape_cast %44 : vector<1x1x256xf32> to vector<1x256xf32>
    %c1_30 = arith.constant 1 : index
    %c0_31 = arith.constant 0 : index
    %46 = vector.load %arg8[%c1_30, %c0_31] : memref<64x256xf32, #tpu.memory_space<vmem>>, vector<1x256xf32>
    tpu.vector_store %arg8[%c1_30, %c0_31], %45 {strides = array<i32>} : memref<64x256xf32, #tpu.memory_space<vmem>>, vector<1x256xf32>,
    %c9 = arith.constant 9 : index
    %47 = memref.load %arg0[%c9] : memref<16xi32, #tpu.memory_space<smem>>
    %48 = arith.index_cast %47 : i32 to index
    %c0_32 = arith.constant 0 : index
    %c0_33 = arith.constant 0 : index
    %49 = vector.load %arg1[%48, %c0_32, %c0_33] : memref<50x1x256xf32, #tpu.memory_space<vmem>>, vector<1x1x256xf32>
    %50 = vector.shape_cast %49 : vector<1x1x256xf32> to vector<1x256xf32>
    %c9_34 = arith.constant 9 : index
    %c0_35 = arith.constant 0 : index
    %51 = vector.load %arg8[%c9_34, %c0_35] : memref<64x256xf32, #tpu.memory_space<vmem>>, vector<1x256xf32>
    tpu.vector_store %arg8[%c9_34, %c0_35], %50 {strides = array<i32>} : memref<64x256xf32, #tpu.memory_space<vmem>>, vector<1x256xf32>,
    %c10 = arith.constant 10 : index
    %52 = memref.load %arg0[%c10] : memref<16xi32, #tpu.memory_space<smem>>
    %53 = arith.index_cast %52 : i32 to index
    %c0_36 = arith.constant 0 : index
    %c0_37 = arith.constant 0 : index
    %54 = vector.load %arg1[%53, %c0_36, %c0_37] : memref<50x1x256xf32, #tpu.memory_space<vmem>>, vector<1x1x256xf32>
    %55 = vector.shape_cast %54 : vector<1x1x256xf32> to vector<1x256xf32>
    %c17 = arith.constant 17 : index
    %c0_38 = arith.constant 0 : index
    %56 = vector.load %arg8[%c17, %c0_38] : memref<64x256xf32, #tpu.memory_space<vmem>>, vector<1x256xf32>
    tpu.vector_store %arg8[%c17, %c0_38], %55 {strides = array<i32>} : memref<64x256xf32, #tpu.memory_space<vmem>>, vector<1x256xf32>,
    %c11 = arith.constant 11 : index
    %57 = memref.load %arg0[%c11] : memref<16xi32, #tpu.memory_space<smem>>
    %58 = arith.index_cast %57 : i32 to index
    %c0_39 = arith.constant 0 : index
    %c0_40 = arith.constant 0 : index
    %59 = vector.load %arg1[%58, %c0_39, %c0_40] : memref<50x1x256xf32, #tpu.memory_space<vmem>>, vector<1x1x256xf32>
    %60 = vector.shape_cast %59 : vector<1x1x256xf32> to vector<1x256xf32>
    %c25 = arith.constant 25 : index
    %c0_41 = arith.constant 0 : index
    %61 = vector.load %arg8[%c25, %c0_41] : memref<64x256xf32, #tpu.memory_space<vmem>>, vector<1x256xf32>
    tpu.vector_store %arg8[%c25, %c0_41], %60 {strides = array<i32>} : memref<64x256xf32, #tpu.memory_space<vmem>>, vector<1x256xf32>,
    %c12 = arith.constant 12 : index
    %62 = memref.load %arg0[%c12] : memref<16xi32, #tpu.memory_space<smem>>
    %63 = arith.index_cast %62 : i32 to index
    %c0_42 = arith.constant 0 : index
    %c0_43 = arith.constant 0 : index
    %64 = vector.load %arg1[%63, %c0_42, %c0_43] : memref<50x1x256xf32, #tpu.memory_space<vmem>>, vector<1x1x256xf32>
    %65 = vector.shape_cast %64 : vector<1x1x256xf32> to vector<1x256xf32>
    %c33 = arith.constant 33 : index
    %c0_44 = arith.constant 0 : index
    %66 = vector.load %arg8[%c33, %c0_44] : memref<64x256xf32, #tpu.memory_space<vmem>>, vector<1x256xf32>
    tpu.vector_store %arg8[%c33, %c0_44], %65 {strides = array<i32>} : memref<64x256xf32, #tpu.memory_space<vmem>>, vector<1x256xf32>,
    %c13 = arith.constant 13 : index
    %67 = memref.load %arg0[%c13] : memref<16xi32, #tpu.memory_space<smem>>
    %68 = arith.index_cast %67 : i32 to index
    %c0_45 = arith.constant 0 : index
    %c0_46 = arith.constant 0 : index
    %69 = vector.load %arg1[%68, %c0_45, %c0_46] : memref<50x1x256xf32, #tpu.memory_space<vmem>>, vector<1x1x256xf32>
    %70 = vector.shape_cast %69 : vector<1x1x256xf32> to vector<1x256xf32>
    %c41 = arith.constant 41 : index
    %c0_47 = arith.constant 0 : index
    %71 = vector.load %arg8[%c41, %c0_47] : memref<64x256xf32, #tpu.memory_space<vmem>>, vector<1x256xf32>
    tpu.vector_store %arg8[%c41, %c0_47], %70 {strides = array<i32>} : memref<64x256xf32, #tpu.memory_space<vmem>>, vector<1x256xf32>,
    %c14 = arith.constant 14 : index
    %72 = memref.load %arg0[%c14] : memref<16xi32, #tpu.memory_space<smem>>
    %73 = arith.index_cast %72 : i32 to index
    %c0_48 = arith.constant 0 : index
    %c0_49 = arith.constant 0 : index
    %74 = vector.load %arg1[%73, %c0_48, %c0_49] : memref<50x1x256xf32, #tpu.memory_space<vmem>>, vector<1x1x256xf32>
    %75 = vector.shape_cast %74 : vector<1x1x256xf32> to vector<1x256xf32>
    %c49 = arith.constant 49 : index
    %c0_50 = arith.constant 0 : index
    %76 = vector.load %arg8[%c49, %c0_50] : memref<64x256xf32, #tpu.memory_space<vmem>>, vector<1x256xf32>
    tpu.vector_store %arg8[%c49, %c0_50], %75 {strides = array<i32>} : memref<64x256xf32, #tpu.memory_space<vmem>>, vector<1x256xf32>,
    %c15 = arith.constant 15 : index
    %77 = memref.load %arg0[%c15] : memref<16xi32, #tpu.memory_space<smem>>
    %78 = arith.index_cast %77 : i32 to index
    %c0_51 = arith.constant 0 : index
    %c0_52 = arith.constant 0 : index
    %79 = vector.load %arg1[%78, %c0_51, %c0_52] : memref<50x1x256xf32, #tpu.memory_space<vmem>>, vector<1x1x256xf32>
    %80 = vector.shape_cast %79 : vector<1x1x256xf32> to vector<1x256xf32>
    %c57 = arith.constant 57 : index
    %c0_53 = arith.constant 0 : index
    %81 = vector.load %arg8[%c57, %c0_53] : memref<64x256xf32, #tpu.memory_space<vmem>>, vector<1x256xf32>
    tpu.vector_store %arg8[%c57, %c0_53], %80 {strides = array<i32>} : memref<64x256xf32, #tpu.memory_space<vmem>>, vector<1x256xf32>,
    %c0_54 = arith.constant 0 : index
    %c0_55 = arith.constant 0 : index
    %82 = vector.load %arg2[%c0_54, %c0_55] : memref<32x128xf32, #tpu.memory_space<vmem>>, vector<32x128xf32>
    %c0_56 = arith.constant 0 : index
    %c0_57 = arith.constant 0 : index
    %83 = vector.load %arg3[%c0_56, %c0_57] : memref<32x128xf32, #tpu.memory_space<vmem>>, vector<32x128xf32>
    %84 = tpu.iota {dimensions = array<i32: 1>} : vector<8x128xi32>
    %c64_i32 = arith.constant 64 : i32
    %85 = vector.broadcast %c64_i32 : i32 to vector<8x128xi32>
    %86 = arith.cmpi sge, %84, %85 : vector<8x128xi32>
    %c96_i32 = arith.constant 96 : i32
    %87 = vector.broadcast %c96_i32 : i32 to vector<8x128xi32>
    %88 = arith.cmpi slt, %84, %87 : vector<8x128xi32>
    %89 = arith.andi %86, %88 : vector<8x128xi1>
    %cst_58 = arith.constant 0.000000e+00 : f32
    %90 = vector.broadcast %cst_58 : f32 to vector<8x32xf32>
    %c0_59 = arith.constant 0 : index
    %c0_60 = arith.constant 0 : index
    %91 = vector.load %arg8[%c0_59, %c0_60] : memref<64x256xf32, #tpu.memory_space<vmem>>, vector<8x128xf32>
    %cst_61 = arith.constant dense<0.000000e+00> : vector<8x128xf32>
    %92 = tpu.matmul %90, %82, %cst_61 {dimension_numbers = #tpu.dot_dimension_numbers<[1], [0], [0], [1], [0, 0, 1, 1], [], []>} : vector<8x32xf32>, vector<32x128xf32>, vector<8x128xf32> -> vector<8x128xf32>
    %93 = arith.addf %91, %92 : vector<8x128xf32>
    %c56_62 = arith.constant 56 : index
    %c128 = arith.constant 128 : index
    %94 = vector.load %arg8[%c56_62, %c128] : memref<64x256xf32, #tpu.memory_space<vmem>>, vector<8x128xf32>
    %cst_63 = arith.constant dense<0.000000e+00> : vector<8x128xf32>
    %95 = tpu.matmul %90, %83, %cst_63 {dimension_numbers = #tpu.dot_dimension_numbers<[1], [0], [0], [1], [0, 0, 1, 1], [], []>} : vector<8x32xf32>, vector<32x128xf32>, vector<8x128xf32> -> vector<8x128xf32>
    %96 = arith.addf %94, %95 : vector<8x128xf32>
    %97 = math.tanh %93 : vector<8x128xf32>
    %98 = arith.negf %93 : vector<8x128xf32>
    %99 = math.exp %98 : vector<8x128xf32>
    %cst_64 = arith.constant 1.000000e+00 : f32
    %100 = vector.broadcast %cst_64 : f32 to vector<8x128xf32>
    %101 = arith.addf %100, %99 : vector<8x128xf32>
    %102 = arith.divf %100, %101 : vector<8x128xf32>
    %103 = arith.select %89, %97, %102 : vector<8x128xi1>, vector<8x128xf32>
    %104 = vector.extract_strided_slice %103 {offsets = [0, 0], sizes = [8, 32], strides = [1, 1]} : vector<8x128xf32> to vector<8x32xf32>
    %105 = vector.extract_strided_slice %103 {offsets = [0, 32], sizes = [8, 32], strides = [1, 1]} : vector<8x128xf32> to vector<8x32xf32>
    %106 = vector.extract_strided_slice %103 {offsets = [0, 64], sizes = [8, 32], strides = [1, 1]} : vector<8x128xf32> to vector<8x32xf32>
    %107 = vector.extract_strided_slice %103 {offsets = [0, 96], sizes = [8, 32], strides = [1, 1]} : vector<8x128xf32> to vector<8x32xf32>
    %108 = arith.mulf %105, %90 : vector<8x32xf32>
    %109 = arith.mulf %104, %106 : vector<8x32xf32>
    %110 = arith.addf %108, %109 : vector<8x32xf32>
    %111 = math.tanh %110 : vector<8x32xf32>
    %112 = arith.mulf %107, %111 : vector<8x32xf32>
    %113 = math.tanh %96 : vector<8x128xf32>
    %114 = arith.negf %96 : vector<8x128xf32>
    %115 = math.exp %114 : vector<8x128xf32>
    %cst_65 = arith.constant 1.000000e+00 : f32
    %116 = vector.broadcast %cst_65 : f32 to vector<8x128xf32>
    %117 = arith.addf %116, %115 : vector<8x128xf32>
    %118 = arith.divf %116, %117 : vector<8x128xf32>
    %119 = arith.select %89, %113, %118 : vector<8x128xi1>, vector<8x128xf32>
    %120 = vector.extract_strided_slice %119 {offsets = [0, 0], sizes = [8, 32], strides = [1, 1]} : vector<8x128xf32> to vector<8x32xf32>
    %121 = vector.extract_strided_slice %119 {offsets = [0, 32], sizes = [8, 32], strides = [1, 1]} : vector<8x128xf32> to vector<8x32xf32>
    %122 = vector.extract_strided_slice %119 {offsets = [0, 64], sizes = [8, 32], strides = [1, 1]} : vector<8x128xf32> to vector<8x32xf32>
    %123 = vector.extract_strided_slice %119 {offsets = [0, 96], sizes = [8, 32], strides = [1, 1]} : vector<8x128xf32> to vector<8x32xf32>
    %124 = arith.mulf %121, %90 : vector<8x32xf32>
    %125 = arith.mulf %120, %122 : vector<8x32xf32>
    %126 = arith.addf %124, %125 : vector<8x32xf32>
    %127 = math.tanh %126 : vector<8x32xf32>
    %128 = arith.mulf %123, %127 : vector<8x32xf32>
    %c8_66 = arith.constant 8 : index
    %c0_67 = arith.constant 0 : index
    %129 = vector.load %arg8[%c8_66, %c0_67] : memref<64x256xf32, #tpu.memory_space<vmem>>, vector<8x128xf32>
    %cst_68 = arith.constant dense<0.000000e+00> : vector<8x128xf32>
    %130 = tpu.matmul %112, %82, %cst_68 {dimension_numbers = #tpu.dot_dimension_numbers<[1], [0], [0], [1], [0, 0, 1, 1], [], []>} : vector<8x32xf32>, vector<32x128xf32>, vector<8x128xf32> -> vector<8x128xf32>
    %131 = arith.addf %129, %130 : vector<8x128xf32>
    %c48_69 = arith.constant 48 : index
    %c128_70 = arith.constant 128 : index
    %132 = vector.load %arg8[%c48_69, %c128_70] : memref<64x256xf32, #tpu.memory_space<vmem>>, vector<8x128xf32>
    %cst_71 = arith.constant dense<0.000000e+00> : vector<8x128xf32>
    %133 = tpu.matmul %128, %83, %cst_71 {dimension_numbers = #tpu.dot_dimension_numbers<[1], [0], [0], [1], [0, 0, 1, 1], [], []>} : vector<8x32xf32>, vector<32x128xf32>, vector<8x128xf32> -> vector<8x128xf32>
    %134 = arith.addf %132, %133 : vector<8x128xf32>
    %135 = math.tanh %131 : vector<8x128xf32>
    %136 = arith.negf %131 : vector<8x128xf32>
    %137 = math.exp %136 : vector<8x128xf32>
    %cst_72 = arith.constant 1.000000e+00 : f32
    %138 = vector.broadcast %cst_72 : f32 to vector<8x128xf32>
    %139 = arith.addf %138, %137 : vector<8x128xf32>
    %140 = arith.divf %138, %139 : vector<8x128xf32>
    %141 = arith.select %89, %135, %140 : vector<8x128xi1>, vector<8x128xf32>
    %142 = vector.extract_strided_slice %141 {offsets = [0, 0], sizes = [8, 32], strides = [1, 1]} : vector<8x128xf32> to vector<8x32xf32>
    %143 = vector.extract_strided_slice %141 {offsets = [0, 32], sizes = [8, 32], strides = [1, 1]} : vector<8x128xf32> to vector<8x32xf32>
    %144 = vector.extract_strided_slice %141 {offsets = [0, 64], sizes = [8, 32], strides = [1, 1]} : vector<8x128xf32> to vector<8x32xf32>
    %145 = vector.extract_strided_slice %141 {offsets = [0, 96], sizes = [8, 32], strides = [1, 1]} : vector<8x128xf32> to vector<8x32xf32>
    %146 = arith.mulf %143, %110 : vector<8x32xf32>
    %147 = arith.mulf %142, %144 : vector<8x32xf32>
    %148 = arith.addf %146, %147 : vector<8x32xf32>
    %149 = math.tanh %148 : vector<8x32xf32>
    %150 = arith.mulf %145, %149 : vector<8x32xf32>
    %151 = math.tanh %134 : vector<8x128xf32>
    %152 = arith.negf %134 : vector<8x128xf32>
    %153 = math.exp %152 : vector<8x128xf32>
    %cst_73 = arith.constant 1.000000e+00 : f32
    %154 = vector.broadcast %cst_73 : f32 to vector<8x128xf32>
    %155 = arith.addf %154, %153 : vector<8x128xf32>
    %156 = arith.divf %154, %155 : vector<8x128xf32>
    %157 = arith.select %89, %151, %156 : vector<8x128xi1>, vector<8x128xf32>
    %158 = vector.extract_strided_slice %157 {offsets = [0, 0], sizes = [8, 32], strides = [1, 1]} : vector<8x128xf32> to vector<8x32xf32>
    %159 = vector.extract_strided_slice %157 {offsets = [0, 32], sizes = [8, 32], strides = [1, 1]} : vector<8x128xf32> to vector<8x32xf32>
    %160 = vector.extract_strided_slice %157 {offsets = [0, 64], sizes = [8, 32], strides = [1, 1]} : vector<8x128xf32> to vector<8x32xf32>
    %161 = vector.extract_strided_slice %157 {offsets = [0, 96], sizes = [8, 32], strides = [1, 1]} : vector<8x128xf32> to vector<8x32xf32>
    %162 = arith.mulf %159, %126 : vector<8x32xf32>
    %163 = arith.mulf %158, %160 : vector<8x32xf32>
    %164 = arith.addf %162, %163 : vector<8x32xf32>
    %165 = math.tanh %164 : vector<8x32xf32>
    %166 = arith.mulf %161, %165 : vector<8x32xf32>
    %c16_74 = arith.constant 16 : index
    %c0_75 = arith.constant 0 : index
    %167 = vector.load %arg8[%c16_74, %c0_75] : memref<64x256xf32, #tpu.memory_space<vmem>>, vector<8x128xf32>
    %cst_76 = arith.constant dense<0.000000e+00> : vector<8x128xf32>
    %168 = tpu.matmul %150, %82, %cst_76 {dimension_numbers = #tpu.dot_dimension_numbers<[1], [0], [0], [1], [0, 0, 1, 1], [], []>} : vector<8x32xf32>, vector<32x128xf32>, vector<8x128xf32> -> vector<8x128xf32>
    %169 = arith.addf %167, %168 : vector<8x128xf32>
    %c40_77 = arith.constant 40 : index
    %c128_78 = arith.constant 128 : index
    %170 = vector.load %arg8[%c40_77, %c128_78] : memref<64x256xf32, #tpu.memory_space<vmem>>, vector<8x128xf32>
    %cst_79 = arith.constant dense<0.000000e+00> : vector<8x128xf32>
    %171 = tpu.matmul %166, %83, %cst_79 {dimension_numbers = #tpu.dot_dimension_numbers<[1], [0], [0], [1], [0, 0, 1, 1], [], []>} : vector<8x32xf32>, vector<32x128xf32>, vector<8x128xf32> -> vector<8x128xf32>
    %172 = arith.addf %170, %171 : vector<8x128xf32>
    %173 = math.tanh %169 : vector<8x128xf32>
    %174 = arith.negf %169 : vector<8x128xf32>
    %175 = math.exp %174 : vector<8x128xf32>
    %cst_80 = arith.constant 1.000000e+00 : f32
    %176 = vector.broadcast %cst_80 : f32 to vector<8x128xf32>
    %177 = arith.addf %176, %175 : vector<8x128xf32>
    %178 = arith.divf %176, %177 : vector<8x128xf32>
    %179 = arith.select %89, %173, %178 : vector<8x128xi1>, vector<8x128xf32>
    %180 = vector.extract_strided_slice %179 {offsets = [0, 0], sizes = [8, 32], strides = [1, 1]} : vector<8x128xf32> to vector<8x32xf32>
    %181 = vector.extract_strided_slice %179 {offsets = [0, 32], sizes = [8, 32], strides = [1, 1]} : vector<8x128xf32> to vector<8x32xf32>
    %182 = vector.extract_strided_slice %179 {offsets = [0, 64], sizes = [8, 32], strides = [1, 1]} : vector<8x128xf32> to vector<8x32xf32>
    %183 = vector.extract_strided_slice %179 {offsets = [0, 96], sizes = [8, 32], strides = [1, 1]} : vector<8x128xf32> to vector<8x32xf32>
    %184 = arith.mulf %181, %148 : vector<8x32xf32>
    %185 = arith.mulf %180, %182 : vector<8x32xf32>
    %186 = arith.addf %184, %185 : vector<8x32xf32>
    %187 = math.tanh %186 : vector<8x32xf32>
    %188 = arith.mulf %183, %187 : vector<8x32xf32>
    %189 = math.tanh %172 : vector<8x128xf32>
    %190 = arith.negf %172 : vector<8x128xf32>
    %191 = math.exp %190 : vector<8x128xf32>
    %cst_81 = arith.constant 1.000000e+00 : f32
    %192 = vector.broadcast %cst_81 : f32 to vector<8x128xf32>
    %193 = arith.addf %192, %191 : vector<8x128xf32>
    %194 = arith.divf %192, %193 : vector<8x128xf32>
    %195 = arith.select %89, %189, %194 : vector<8x128xi1>, vector<8x128xf32>
    %196 = vector.extract_strided_slice %195 {offsets = [0, 0], sizes = [8, 32], strides = [1, 1]} : vector<8x128xf32> to vector<8x32xf32>
    %197 = vector.extract_strided_slice %195 {offsets = [0, 32], sizes = [8, 32], strides = [1, 1]} : vector<8x128xf32> to vector<8x32xf32>
    %198 = vector.extract_strided_slice %195 {offsets = [0, 64], sizes = [8, 32], strides = [1, 1]} : vector<8x128xf32> to vector<8x32xf32>
    %199 = vector.extract_strided_slice %195 {offsets = [0, 96], sizes = [8, 32], strides = [1, 1]} : vector<8x128xf32> to vector<8x32xf32>
    %200 = arith.mulf %197, %164 : vector<8x32xf32>
    %201 = arith.mulf %196, %198 : vector<8x32xf32>
    %202 = arith.addf %200, %201 : vector<8x32xf32>
    %203 = math.tanh %202 : vector<8x32xf32>
    %204 = arith.mulf %199, %203 : vector<8x32xf32>
    %c24_82 = arith.constant 24 : index
    %c0_83 = arith.constant 0 : index
    %205 = vector.load %arg8[%c24_82, %c0_83] : memref<64x256xf32, #tpu.memory_space<vmem>>, vector<8x128xf32>
    %cst_84 = arith.constant dense<0.000000e+00> : vector<8x128xf32>
    %206 = tpu.matmul %188, %82, %cst_84 {dimension_numbers = #tpu.dot_dimension_numbers<[1], [0], [0], [1], [0, 0, 1, 1], [], []>} : vector<8x32xf32>, vector<32x128xf32>, vector<8x128xf32> -> vector<8x128xf32>
    %207 = arith.addf %205, %206 : vector<8x128xf32>
    %c32_85 = arith.constant 32 : index
    %c128_86 = arith.constant 128 : index
    %208 = vector.load %arg8[%c32_85, %c128_86] : memref<64x256xf32, #tpu.memory_space<vmem>>, vector<8x128xf32>
    %cst_87 = arith.constant dense<0.000000e+00> : vector<8x128xf32>
    %209 = tpu.matmul %204, %83, %cst_87 {dimension_numbers = #tpu.dot_dimension_numbers<[1], [0], [0], [1], [0, 0, 1, 1], [], []>} : vector<8x32xf32>, vector<32x128xf32>, vector<8x128xf32> -> vector<8x128xf32>
    %210 = arith.addf %208, %209 : vector<8x128xf32>
    %211 = math.tanh %207 : vector<8x128xf32>
    %212 = arith.negf %207 : vector<8x128xf32>
    %213 = math.exp %212 : vector<8x128xf32>
    %cst_88 = arith.constant 1.000000e+00 : f32
    %214 = vector.broadcast %cst_88 : f32 to vector<8x128xf32>
    %215 = arith.addf %214, %213 : vector<8x128xf32>
    %216 = arith.divf %214, %215 : vector<8x128xf32>
    %217 = arith.select %89, %211, %216 : vector<8x128xi1>, vector<8x128xf32>
    %218 = vector.extract_strided_slice %217 {offsets = [0, 0], sizes = [8, 32], strides = [1, 1]} : vector<8x128xf32> to vector<8x32xf32>
    %219 = vector.extract_strided_slice %217 {offsets = [0, 32], sizes = [8, 32], strides = [1, 1]} : vector<8x128xf32> to vector<8x32xf32>
    %220 = vector.extract_strided_slice %217 {offsets = [0, 64], sizes = [8, 32], strides = [1, 1]} : vector<8x128xf32> to vector<8x32xf32>
    %221 = vector.extract_strided_slice %217 {offsets = [0, 96], sizes = [8, 32], strides = [1, 1]} : vector<8x128xf32> to vector<8x32xf32>
    %222 = arith.mulf %219, %186 : vector<8x32xf32>
    %223 = arith.mulf %218, %220 : vector<8x32xf32>
    %224 = arith.addf %222, %223 : vector<8x32xf32>
    %225 = math.tanh %224 : vector<8x32xf32>
    %226 = arith.mulf %221, %225 : vector<8x32xf32>
    %227 = math.tanh %210 : vector<8x128xf32>
    %228 = arith.negf %210 : vector<8x128xf32>
    %229 = math.exp %228 : vector<8x128xf32>
    %cst_89 = arith.constant 1.000000e+00 : f32
    %230 = vector.broadcast %cst_89 : f32 to vector<8x128xf32>
    %231 = arith.addf %230, %229 : vector<8x128xf32>
    %232 = arith.divf %230, %231 : vector<8x128xf32>
    %233 = arith.select %89, %227, %232 : vector<8x128xi1>, vector<8x128xf32>
    %234 = vector.extract_strided_slice %233 {offsets = [0, 0], sizes = [8, 32], strides = [1, 1]} : vector<8x128xf32> to vector<8x32xf32>
    %235 = vector.extract_strided_slice %233 {offsets = [0, 32], sizes = [8, 32], strides = [1, 1]} : vector<8x128xf32> to vector<8x32xf32>
    %236 = vector.extract_strided_slice %233 {offsets = [0, 64], sizes = [8, 32], strides = [1, 1]} : vector<8x128xf32> to vector<8x32xf32>
    %237 = vector.extract_strided_slice %233 {offsets = [0, 96], sizes = [8, 32], strides = [1, 1]} : vector<8x128xf32> to vector<8x32xf32>
    %238 = arith.mulf %235, %202 : vector<8x32xf32>
    %239 = arith.mulf %234, %236 : vector<8x32xf32>
    %240 = arith.addf %238, %239 : vector<8x32xf32>
    %241 = math.tanh %240 : vector<8x32xf32>
    %242 = arith.mulf %237, %241 : vector<8x32xf32>
    %c32_90 = arith.constant 32 : index
    %c0_91 = arith.constant 0 : index
    %243 = vector.load %arg8[%c32_90, %c0_91] : memref<64x256xf32, #tpu.memory_space<vmem>>, vector<8x128xf32>
    %cst_92 = arith.constant dense<0.000000e+00> : vector<8x128xf32>
    %244 = tpu.matmul %226, %82, %cst_92 {dimension_numbers = #tpu.dot_dimension_numbers<[1], [0], [0], [1], [0, 0, 1, 1], [], []>} : vector<8x32xf32>, vector<32x128xf32>, vector<8x128xf32> -> vector<8x128xf32>
    %245 = arith.addf %243, %244 : vector<8x128xf32>
    %c24_93 = arith.constant 24 : index
    %c128_94 = arith.constant 128 : index
    %246 = vector.load %arg8[%c24_93, %c128_94] : memref<64x256xf32, #tpu.memory_space<vmem>>, vector<8x128xf32>
    %cst_95 = arith.constant dense<0.000000e+00> : vector<8x128xf32>
    %247 = tpu.matmul %242, %83, %cst_95 {dimension_numbers = #tpu.dot_dimension_numbers<[1], [0], [0], [1], [0, 0, 1, 1], [], []>} : vector<8x32xf32>, vector<32x128xf32>, vector<8x128xf32> -> vector<8x128xf32>
    %248 = arith.addf %246, %247 : vector<8x128xf32>
    %249 = math.tanh %245 : vector<8x128xf32>
    %250 = arith.negf %245 : vector<8x128xf32>
    %251 = math.exp %250 : vector<8x128xf32>
    %cst_96 = arith.constant 1.000000e+00 : f32
    %252 = vector.broadcast %cst_96 : f32 to vector<8x128xf32>
    %253 = arith.addf %252, %251 : vector<8x128xf32>
    %254 = arith.divf %252, %253 : vector<8x128xf32>
    %255 = arith.select %89, %249, %254 : vector<8x128xi1>, vector<8x128xf32>
    %256 = vector.extract_strided_slice %255 {offsets = [0, 0], sizes = [8, 32], strides = [1, 1]} : vector<8x128xf32> to vector<8x32xf32>
    %257 = vector.extract_strided_slice %255 {offsets = [0, 32], sizes = [8, 32], strides = [1, 1]} : vector<8x128xf32> to vector<8x32xf32>
    %258 = vector.extract_strided_slice %255 {offsets = [0, 64], sizes = [8, 32], strides = [1, 1]} : vector<8x128xf32> to vector<8x32xf32>
    %259 = vector.extract_strided_slice %255 {offsets = [0, 96], sizes = [8, 32], strides = [1, 1]} : vector<8x128xf32> to vector<8x32xf32>
    %260 = arith.mulf %257, %224 : vector<8x32xf32>
    %261 = arith.mulf %256, %258 : vector<8x32xf32>
    %262 = arith.addf %260, %261 : vector<8x32xf32>
    %263 = math.tanh %262 : vector<8x32xf32>
    %264 = arith.mulf %259, %263 : vector<8x32xf32>
    %265 = math.tanh %248 : vector<8x128xf32>
    %266 = arith.negf %248 : vector<8x128xf32>
    %267 = math.exp %266 : vector<8x128xf32>
    %cst_97 = arith.constant 1.000000e+00 : f32
    %268 = vector.broadcast %cst_97 : f32 to vector<8x128xf32>
    %269 = arith.addf %268, %267 : vector<8x128xf32>
    %270 = arith.divf %268, %269 : vector<8x128xf32>
    %271 = arith.select %89, %265, %270 : vector<8x128xi1>, vector<8x128xf32>
    %272 = vector.extract_strided_slice %271 {offsets = [0, 0], sizes = [8, 32], strides = [1, 1]} : vector<8x128xf32> to vector<8x32xf32>
    %273 = vector.extract_strided_slice %271 {offsets = [0, 32], sizes = [8, 32], strides = [1, 1]} : vector<8x128xf32> to vector<8x32xf32>
    %274 = vector.extract_strided_slice %271 {offsets = [0, 64], sizes = [8, 32], strides = [1, 1]} : vector<8x128xf32> to vector<8x32xf32>
    %275 = vector.extract_strided_slice %271 {offsets = [0, 96], sizes = [8, 32], strides = [1, 1]} : vector<8x128xf32> to vector<8x32xf32>
    %276 = arith.mulf %273, %240 : vector<8x32xf32>
    %277 = arith.mulf %272, %274 : vector<8x32xf32>
    %278 = arith.addf %276, %277 : vector<8x32xf32>
    %279 = math.tanh %278 : vector<8x32xf32>
    %280 = arith.mulf %275, %279 : vector<8x32xf32>
    %c40_98 = arith.constant 40 : index
    %c0_99 = arith.constant 0 : index
    %281 = vector.load %arg8[%c40_98, %c0_99] : memref<64x256xf32, #tpu.memory_space<vmem>>, vector<8x128xf32>
    %cst_100 = arith.constant dense<0.000000e+00> : vector<8x128xf32>
    %282 = tpu.matmul %264, %82, %cst_100 {dimension_numbers = #tpu.dot_dimension_numbers<[1], [0], [0], [1], [0, 0, 1, 1], [], []>} : vector<8x32xf32>, vector<32x128xf32>, vector<8x128xf32> -> vector<8x128xf32>
    %283 = arith.addf %281, %282 : vector<8x128xf32>
    %c16_101 = arith.constant 16 : index
    %c128_102 = arith.constant 128 : index
    %284 = vector.load %arg8[%c16_101, %c128_102] : memref<64x256xf32, #tpu.memory_space<vmem>>, vector<8x128xf32>
    %cst_103 = arith.constant dense<0.000000e+00> : vector<8x128xf32>
    %285 = tpu.matmul %280, %83, %cst_103 {dimension_numbers = #tpu.dot_dimension_numbers<[1], [0], [0], [1], [0, 0, 1, 1], [], []>} : vector<8x32xf32>, vector<32x128xf32>, vector<8x128xf32> -> vector<8x128xf32>
    %286 = arith.addf %284, %285 : vector<8x128xf32>
    %287 = math.tanh %283 : vector<8x128xf32>
    %288 = arith.negf %283 : vector<8x128xf32>
    %289 = math.exp %288 : vector<8x128xf32>
    %cst_104 = arith.constant 1.000000e+00 : f32
    %290 = vector.broadcast %cst_104 : f32 to vector<8x128xf32>
    %291 = arith.addf %290, %289 : vector<8x128xf32>
    %292 = arith.divf %290, %291 : vector<8x128xf32>
    %293 = arith.select %89, %287, %292 : vector<8x128xi1>, vector<8x128xf32>
    %294 = vector.extract_strided_slice %293 {offsets = [0, 0], sizes = [8, 32], strides = [1, 1]} : vector<8x128xf32> to vector<8x32xf32>
    %295 = vector.extract_strided_slice %293 {offsets = [0, 32], sizes = [8, 32], strides = [1, 1]} : vector<8x128xf32> to vector<8x32xf32>
    %296 = vector.extract_strided_slice %293 {offsets = [0, 64], sizes = [8, 32], strides = [1, 1]} : vector<8x128xf32> to vector<8x32xf32>
    %297 = vector.extract_strided_slice %293 {offsets = [0, 96], sizes = [8, 32], strides = [1, 1]} : vector<8x128xf32> to vector<8x32xf32>
    %298 = arith.mulf %295, %262 : vector<8x32xf32>
    %299 = arith.mulf %294, %296 : vector<8x32xf32>
    %300 = arith.addf %298, %299 : vector<8x32xf32>
    %301 = math.tanh %300 : vector<8x32xf32>
    %302 = arith.mulf %297, %301 : vector<8x32xf32>
    %303 = math.tanh %286 : vector<8x128xf32>
    %304 = arith.negf %286 : vector<8x128xf32>
    %305 = math.exp %304 : vector<8x128xf32>
    %cst_105 = arith.constant 1.000000e+00 : f32
    %306 = vector.broadcast %cst_105 : f32 to vector<8x128xf32>
    %307 = arith.addf %306, %305 : vector<8x128xf32>
    %308 = arith.divf %306, %307 : vector<8x128xf32>
    %309 = arith.select %89, %303, %308 : vector<8x128xi1>, vector<8x128xf32>
    %310 = vector.extract_strided_slice %309 {offsets = [0, 0], sizes = [8, 32], strides = [1, 1]} : vector<8x128xf32> to vector<8x32xf32>
    %311 = vector.extract_strided_slice %309 {offsets = [0, 32], sizes = [8, 32], strides = [1, 1]} : vector<8x128xf32> to vector<8x32xf32>
    %312 = vector.extract_strided_slice %309 {offsets = [0, 64], sizes = [8, 32], strides = [1, 1]} : vector<8x128xf32> to vector<8x32xf32>
    %313 = vector.extract_strided_slice %309 {offsets = [0, 96], sizes = [8, 32], strides = [1, 1]} : vector<8x128xf32> to vector<8x32xf32>
    %314 = arith.mulf %311, %278 : vector<8x32xf32>
    %315 = arith.mulf %310, %312 : vector<8x32xf32>
    %316 = arith.addf %314, %315 : vector<8x32xf32>
    %317 = math.tanh %316 : vector<8x32xf32>
    %318 = arith.mulf %313, %317 : vector<8x32xf32>
    %c48_106 = arith.constant 48 : index
    %c0_107 = arith.constant 0 : index
    %319 = vector.load %arg8[%c48_106, %c0_107] : memref<64x256xf32, #tpu.memory_space<vmem>>, vector<8x128xf32>
    %cst_108 = arith.constant dense<0.000000e+00> : vector<8x128xf32>
    %320 = tpu.matmul %302, %82, %cst_108 {dimension_numbers = #tpu.dot_dimension_numbers<[1], [0], [0], [1], [0, 0, 1, 1], [], []>} : vector<8x32xf32>, vector<32x128xf32>, vector<8x128xf32> -> vector<8x128xf32>
    %321 = arith.addf %319, %320 : vector<8x128xf32>
    %c8_109 = arith.constant 8 : index
    %c128_110 = arith.constant 128 : index
    %322 = vector.load %arg8[%c8_109, %c128_110] : memref<64x256xf32, #tpu.memory_space<vmem>>, vector<8x128xf32>
    %cst_111 = arith.constant dense<0.000000e+00> : vector<8x128xf32>
    %323 = tpu.matmul %318, %83, %cst_111 {dimension_numbers = #tpu.dot_dimension_numbers<[1], [0], [0], [1], [0, 0, 1, 1], [], []>} : vector<8x32xf32>, vector<32x128xf32>, vector<8x128xf32> -> vector<8x128xf32>
    %324 = arith.addf %322, %323 : vector<8x128xf32>
    %325 = math.tanh %321 : vector<8x128xf32>
    %326 = arith.negf %321 : vector<8x128xf32>
    %327 = math.exp %326 : vector<8x128xf32>
    %cst_112 = arith.constant 1.000000e+00 : f32
    %328 = vector.broadcast %cst_112 : f32 to vector<8x128xf32>
    %329 = arith.addf %328, %327 : vector<8x128xf32>
    %330 = arith.divf %328, %329 : vector<8x128xf32>
    %331 = arith.select %89, %325, %330 : vector<8x128xi1>, vector<8x128xf32>
    %332 = vector.extract_strided_slice %331 {offsets = [0, 0], sizes = [8, 32], strides = [1, 1]} : vector<8x128xf32> to vector<8x32xf32>
    %333 = vector.extract_strided_slice %331 {offsets = [0, 32], sizes = [8, 32], strides = [1, 1]} : vector<8x128xf32> to vector<8x32xf32>
    %334 = vector.extract_strided_slice %331 {offsets = [0, 64], sizes = [8, 32], strides = [1, 1]} : vector<8x128xf32> to vector<8x32xf32>
    %335 = vector.extract_strided_slice %331 {offsets = [0, 96], sizes = [8, 32], strides = [1, 1]} : vector<8x128xf32> to vector<8x32xf32>
    %336 = arith.mulf %333, %300 : vector<8x32xf32>
    %337 = arith.mulf %332, %334 : vector<8x32xf32>
    %338 = arith.addf %336, %337 : vector<8x32xf32>
    %339 = math.tanh %338 : vector<8x32xf32>
    %340 = arith.mulf %335, %339 : vector<8x32xf32>
    %341 = math.tanh %324 : vector<8x128xf32>
    %342 = arith.negf %324 : vector<8x128xf32>
    %343 = math.exp %342 : vector<8x128xf32>
    %cst_113 = arith.constant 1.000000e+00 : f32
    %344 = vector.broadcast %cst_113 : f32 to vector<8x128xf32>
    %345 = arith.addf %344, %343 : vector<8x128xf32>
    %346 = arith.divf %344, %345 : vector<8x128xf32>
    %347 = arith.select %89, %341, %346 : vector<8x128xi1>, vector<8x128xf32>
    %348 = vector.extract_strided_slice %347 {offsets = [0, 0], sizes = [8, 32], strides = [1, 1]} : vector<8x128xf32> to vector<8x32xf32>
    %349 = vector.extract_strided_slice %347 {offsets = [0, 32], sizes = [8, 32], strides = [1, 1]} : vector<8x128xf32> to vector<8x32xf32>
    %350 = vector.extract_strided_slice %347 {offsets = [0, 64], sizes = [8, 32], strides = [1, 1]} : vector<8x128xf32> to vector<8x32xf32>
    %351 = vector.extract_strided_slice %347 {offsets = [0, 96], sizes = [8, 32], strides = [1, 1]} : vector<8x128xf32> to vector<8x32xf32>
    %352 = arith.mulf %349, %316 : vector<8x32xf32>
    %353 = arith.mulf %348, %350 : vector<8x32xf32>
    %354 = arith.addf %352, %353 : vector<8x32xf32>
    %355 = math.tanh %354 : vector<8x32xf32>
    %356 = arith.mulf %351, %355 : vector<8x32xf32>
    %c56_114 = arith.constant 56 : index
    %c0_115 = arith.constant 0 : index
    %357 = vector.load %arg8[%c56_114, %c0_115] : memref<64x256xf32, #tpu.memory_space<vmem>>, vector<8x128xf32>
    %cst_116 = arith.constant dense<0.000000e+00> : vector<8x128xf32>
    %358 = tpu.matmul %340, %82, %cst_116 {dimension_numbers = #tpu.dot_dimension_numbers<[1], [0], [0], [1], [0, 0, 1, 1], [], []>} : vector<8x32xf32>, vector<32x128xf32>, vector<8x128xf32> -> vector<8x128xf32>
    %359 = arith.addf %357, %358 : vector<8x128xf32>
    %c0_117 = arith.constant 0 : index
    %c128_118 = arith.constant 128 : index
    %360 = vector.load %arg8[%c0_117, %c128_118] : memref<64x256xf32, #tpu.memory_space<vmem>>, vector<8x128xf32>
    %cst_119 = arith.constant dense<0.000000e+00> : vector<8x128xf32>
    %361 = tpu.matmul %356, %83, %cst_119 {dimension_numbers = #tpu.dot_dimension_numbers<[1], [0], [0], [1], [0, 0, 1, 1], [], []>} : vector<8x32xf32>, vector<32x128xf32>, vector<8x128xf32> -> vector<8x128xf32>
    %362 = arith.addf %360, %361 : vector<8x128xf32>
    %363 = math.tanh %359 : vector<8x128xf32>
    %364 = arith.negf %359 : vector<8x128xf32>
    %365 = math.exp %364 : vector<8x128xf32>
    %cst_120 = arith.constant 1.000000e+00 : f32
    %366 = vector.broadcast %cst_120 : f32 to vector<8x128xf32>
    %367 = arith.addf %366, %365 : vector<8x128xf32>
    %368 = arith.divf %366, %367 : vector<8x128xf32>
    %369 = arith.select %89, %363, %368 : vector<8x128xi1>, vector<8x128xf32>
    %370 = vector.extract_strided_slice %369 {offsets = [0, 0], sizes = [8, 32], strides = [1, 1]} : vector<8x128xf32> to vector<8x32xf32>
    %371 = vector.extract_strided_slice %369 {offsets = [0, 32], sizes = [8, 32], strides = [1, 1]} : vector<8x128xf32> to vector<8x32xf32>
    %372 = vector.extract_strided_slice %369 {offsets = [0, 64], sizes = [8, 32], strides = [1, 1]} : vector<8x128xf32> to vector<8x32xf32>
    %373 = vector.extract_strided_slice %369 {offsets = [0, 96], sizes = [8, 32], strides = [1, 1]} : vector<8x128xf32> to vector<8x32xf32>
    %374 = arith.mulf %371, %338 : vector<8x32xf32>
    %375 = arith.mulf %370, %372 : vector<8x32xf32>
    %376 = arith.addf %374, %375 : vector<8x32xf32>
    %377 = math.tanh %376 : vector<8x32xf32>
    %378 = arith.mulf %373, %377 : vector<8x32xf32>
    %379 = math.tanh %362 : vector<8x128xf32>
    %380 = arith.negf %362 : vector<8x128xf32>
    %381 = math.exp %380 : vector<8x128xf32>
    %cst_121 = arith.constant 1.000000e+00 : f32
    %382 = vector.broadcast %cst_121 : f32 to vector<8x128xf32>
    %383 = arith.addf %382, %381 : vector<8x128xf32>
    %384 = arith.divf %382, %383 : vector<8x128xf32>
    %385 = arith.select %89, %379, %384 : vector<8x128xi1>, vector<8x128xf32>
    %386 = vector.extract_strided_slice %385 {offsets = [0, 0], sizes = [8, 32], strides = [1, 1]} : vector<8x128xf32> to vector<8x32xf32>
    %387 = vector.extract_strided_slice %385 {offsets = [0, 32], sizes = [8, 32], strides = [1, 1]} : vector<8x128xf32> to vector<8x32xf32>
    %388 = vector.extract_strided_slice %385 {offsets = [0, 64], sizes = [8, 32], strides = [1, 1]} : vector<8x128xf32> to vector<8x32xf32>
    %389 = vector.extract_strided_slice %385 {offsets = [0, 96], sizes = [8, 32], strides = [1, 1]} : vector<8x128xf32> to vector<8x32xf32>
    %390 = arith.mulf %387, %354 : vector<8x32xf32>
    %391 = arith.mulf %386, %388 : vector<8x32xf32>
    %392 = arith.addf %390, %391 : vector<8x32xf32>
    %393 = math.tanh %392 : vector<8x32xf32>
    %394 = arith.mulf %389, %393 : vector<8x32xf32>
    %c0_122 = arith.constant 0 : index
    %c0_123 = arith.constant 0 : index
    %395 = vector.load %arg4[%c0_122, %c0_123] : memref<1x64xf32, #tpu.memory_space<vmem>>, vector<1x64xf32>
    %396 = tpu.concatenate %112, %394 in 1 : vector<8x32xf32>, vector<8x32xf32> -> vector<8x64xf32>
    %397 = tpu.concatenate %150, %356 in 1 : vector<8x32xf32>, vector<8x32xf32> -> vector<8x64xf32>
    %398 = tpu.concatenate %188, %318 in 1 : vector<8x32xf32>, vector<8x32xf32> -> vector<8x64xf32>
    %399 = tpu.concatenate %226, %280 in 1 : vector<8x32xf32>, vector<8x32xf32> -> vector<8x64xf32>
    %400 = tpu.concatenate %264, %242 in 1 : vector<8x32xf32>, vector<8x32xf32> -> vector<8x64xf32>
    %401 = tpu.concatenate %302, %204 in 1 : vector<8x32xf32>, vector<8x32xf32> -> vector<8x64xf32>
    %402 = tpu.concatenate %340, %166 in 1 : vector<8x32xf32>, vector<8x32xf32> -> vector<8x64xf32>
    %403 = tpu.concatenate %378, %128 in 1 : vector<8x32xf32>, vector<8x32xf32> -> vector<8x64xf32>
    %404 = vector.broadcast %395 : vector<1x64xf32> to vector<8x64xf32>
    %405 = arith.mulf %396, %404 : vector<8x64xf32>
    %cst_124 = arith.constant dense<0.000000e+00> : vector<8xf32>
    %406 = vector.multi_reduction <add>, %405, %cst_124 [1] : vector<8x64xf32> to vector<8xf32>
    %407 = vector.shape_cast %406 : vector<8xf32> to vector<8x1xf32>
    %408 = vector.broadcast %395 : vector<1x64xf32> to vector<8x64xf32>
    %409 = arith.mulf %397, %408 : vector<8x64xf32>
    %cst_125 = arith.constant dense<0.000000e+00> : vector<8xf32>
    %410 = vector.multi_reduction <add>, %409, %cst_125 [1] : vector<8x64xf32> to vector<8xf32>
    %411 = vector.shape_cast %410 : vector<8xf32> to vector<8x1xf32>
    %412 = vector.broadcast %395 : vector<1x64xf32> to vector<8x64xf32>
    %413 = arith.mulf %398, %412 : vector<8x64xf32>
    %cst_126 = arith.constant dense<0.000000e+00> : vector<8xf32>
    %414 = vector.multi_reduction <add>, %413, %cst_126 [1] : vector<8x64xf32> to vector<8xf32>
    %415 = vector.shape_cast %414 : vector<8xf32> to vector<8x1xf32>
    %416 = vector.broadcast %395 : vector<1x64xf32> to vector<8x64xf32>
    %417 = arith.mulf %399, %416 : vector<8x64xf32>
    %cst_127 = arith.constant dense<0.000000e+00> : vector<8xf32>
    %418 = vector.multi_reduction <add>, %417, %cst_127 [1] : vector<8x64xf32> to vector<8xf32>
    %419 = vector.shape_cast %418 : vector<8xf32> to vector<8x1xf32>
    %420 = vector.broadcast %395 : vector<1x64xf32> to vector<8x64xf32>
    %421 = arith.mulf %400, %420 : vector<8x64xf32>
    %cst_128 = arith.constant dense<0.000000e+00> : vector<8xf32>
    %422 = vector.multi_reduction <add>, %421, %cst_128 [1] : vector<8x64xf32> to vector<8xf32>
    %423 = vector.shape_cast %422 : vector<8xf32> to vector<8x1xf32>
    %424 = vector.broadcast %395 : vector<1x64xf32> to vector<8x64xf32>
    %425 = arith.mulf %401, %424 : vector<8x64xf32>
    %cst_129 = arith.constant dense<0.000000e+00> : vector<8xf32>
    %426 = vector.multi_reduction <add>, %425, %cst_129 [1] : vector<8x64xf32> to vector<8xf32>
    %427 = vector.shape_cast %426 : vector<8xf32> to vector<8x1xf32>
    %428 = vector.broadcast %395 : vector<1x64xf32> to vector<8x64xf32>
    %429 = arith.mulf %402, %428 : vector<8x64xf32>
    %cst_130 = arith.constant dense<0.000000e+00> : vector<8xf32>
    %430 = vector.multi_reduction <add>, %429, %cst_130 [1] : vector<8x64xf32> to vector<8xf32>
    %431 = vector.shape_cast %430 : vector<8xf32> to vector<8x1xf32>
    %432 = vector.broadcast %395 : vector<1x64xf32> to vector<8x64xf32>
    %433 = arith.mulf %403, %432 : vector<8x64xf32>
    %cst_131 = arith.constant dense<0.000000e+00> : vector<8xf32>
    %434 = vector.multi_reduction <add>, %433, %cst_131 [1] : vector<8x64xf32> to vector<8xf32>
    %435 = vector.shape_cast %434 : vector<8xf32> to vector<8x1xf32>
    %436 = arith.maximumf %407, %411 : vector<8x1xf32>
    %437 = arith.maximumf %436, %415 : vector<8x1xf32>
    %438 = arith.maximumf %437, %419 : vector<8x1xf32>
    %439 = arith.maximumf %438, %423 : vector<8x1xf32>
    %440 = arith.maximumf %439, %427 : vector<8x1xf32>
    %441 = arith.maximumf %440, %431 : vector<8x1xf32>
    %442 = arith.maximumf %441, %435 : vector<8x1xf32>
    %443 = arith.subf %407, %442 : vector<8x1xf32>
    %444 = math.exp %443 : vector<8x1xf32>
    %445 = arith.subf %411, %442 : vector<8x1xf32>
    %446 = math.exp %445 : vector<8x1xf32>
    %447 = arith.subf %415, %442 : vector<8x1xf32>
    %448 = math.exp %447 : vector<8x1xf32>
    %449 = arith.subf %419, %442 : vector<8x1xf32>
    %450 = math.exp %449 : vector<8x1xf32>
    %451 = arith.subf %423, %442 : vector<8x1xf32>
    %452 = math.exp %451 : vector<8x1xf32>
    %453 = arith.subf %427, %442 : vector<8x1xf32>
    %454 = math.exp %453 : vector<8x1xf32>
    %455 = arith.subf %431, %442 : vector<8x1xf32>
    %456 = math.exp %455 : vector<8x1xf32>
    %457 = arith.subf %435, %442 : vector<8x1xf32>
    %458 = math.exp %457 : vector<8x1xf32>
    %459 = arith.addf %444, %446 : vector<8x1xf32>
    %460 = arith.addf %459, %448 : vector<8x1xf32>
    %461 = arith.addf %460, %450 : vector<8x1xf32>
    %462 = arith.addf %461, %452 : vector<8x1xf32>
    %463 = arith.addf %462, %454 : vector<8x1xf32>
    %464 = arith.addf %463, %456 : vector<8x1xf32>
    %465 = arith.addf %464, %458 : vector<8x1xf32>
    %466 = vector.broadcast %444 : vector<8x1xf32> to vector<8x64xf32>
    %467 = arith.mulf %466, %396 : vector<8x64xf32>
    %468 = vector.broadcast %446 : vector<8x1xf32> to vector<8x64xf32>
    %469 = arith.mulf %468, %397 : vector<8x64xf32>
    %470 = arith.addf %467, %469 : vector<8x64xf32>
    %471 = vector.broadcast %448 : vector<8x1xf32> to vector<8x64xf32>
    %472 = arith.mulf %471, %398 : vector<8x64xf32>
    %473 = arith.addf %470, %472 : vector<8x64xf32>
    %474 = vector.broadcast %450 : vector<8x1xf32> to vector<8x64xf32>
    %475 = arith.mulf %474, %399 : vector<8x64xf32>
    %476 = arith.addf %473, %475 : vector<8x64xf32>
    %477 = vector.broadcast %452 : vector<8x1xf32> to vector<8x64xf32>
    %478 = arith.mulf %477, %400 : vector<8x64xf32>
    %479 = arith.addf %476, %478 : vector<8x64xf32>
    %480 = vector.broadcast %454 : vector<8x1xf32> to vector<8x64xf32>
    %481 = arith.mulf %480, %401 : vector<8x64xf32>
    %482 = arith.addf %479, %481 : vector<8x64xf32>
    %483 = vector.broadcast %456 : vector<8x1xf32> to vector<8x64xf32>
    %484 = arith.mulf %483, %402 : vector<8x64xf32>
    %485 = arith.addf %482, %484 : vector<8x64xf32>
    %486 = vector.broadcast %458 : vector<8x1xf32> to vector<8x64xf32>
    %487 = arith.mulf %486, %403 : vector<8x64xf32>
    %488 = arith.addf %485, %487 : vector<8x64xf32>
    %489 = vector.broadcast %465 : vector<8x1xf32> to vector<8x64xf32>
    %490 = arith.divf %488, %489 : vector<8x64xf32>
    %c0_132 = arith.constant 0 : index
    %c0_133 = arith.constant 0 : index
    %491 = vector.load %arg5[%c0_132, %c0_133] : memref<64x4xf32, #tpu.memory_space<vmem>>, vector<64x4xf32>
    %cst_134 = arith.constant dense<0.000000e+00> : vector<8x4xf32>
    %492 = tpu.matmul %490, %491, %cst_134 {dimension_numbers = #tpu.dot_dimension_numbers<[1], [0], [0], [1], [0, 0, 1, 1], [], []>} : vector<8x64xf32>, vector<64x4xf32>, vector<8x4xf32> -> vector<8x4xf32>
    %c0_135 = arith.constant 0 : index
    %c0_136 = arith.constant 0 : index
    %493 = vector.load %arg6[%c0_135, %c0_136] : memref<1x4xf32, #tpu.memory_space<vmem>>, vector<1x4xf32>
    %494 = vector.broadcast %493 : vector<1x4xf32> to vector<8x4xf32>
    %495 = arith.addf %492, %494 : vector<8x4xf32>
    %c0_137 = arith.constant 0 : index
    %c0_138 = arith.constant 0 : index
    %496 = vector.load %arg7[%c0_137, %c0_138] : memref<8x4xf32, #tpu.memory_space<vmem>>, vector<8x4xf32>
    tpu.vector_store %arg7[%c0_137, %c0_138], %495 {strides = array<i32>} : memref<8x4xf32, #tpu.memory_space<vmem>>, vector<8x4xf32>,
    return
  }
}

</mosaic_0001>

<llo_original>
// kernel: bilstm_attention_forward.1
$region0: #{bilstm_attention_forward.1}
  #allocation0 [shape = 'u32[]', space=smem, size = 0x4, offset = 0x4, fixed_abs, tag = 'smem constant byte address 0x4 - core index']
  #allocation1 [shape = 'u32[144,128]{1,0:T(1,128)}', space=vmem, size = 0x12000, scoped, tag = 'internal scratch']
  #allocation2 [shape = 'f32[64,256]{1,0:T(8,128)}', space=vmem, size = 0x10000, scoped, tag = 'scratch operand']
  %s0 = inlined_call_operand.vmem [shape: s32[16], index: 0, kind: input, shape index: {}]
  %s1 = inlined_call_operand.hbm [shape: f32[50,1,256], index: 1, kind: input, shape index: {}]
  %s2 = inlined_call_operand.vmem [shape: f32[32,128], index: 2, kind: input, shape index: {}]
  %s3 = inlined_call_operand.vmem [shape: f32[32,128], index: 3, kind: input, shape index: {}]
  %s4 = inlined_call_operand.vmem [shape: f32[1,64], index: 4, kind: input, shape index: {}]
  %s5 = inlined_call_operand.vmem [shape: f32[64,4], index: 5, kind: input, shape index: {}]
  %s6 = inlined_call_operand.vmem [shape: f32[1,4], index: 6, kind: input, shape index: {}]
  %s7 = inlined_call_operand.vmem [shape: f32[8,4], index: 7, kind: output, shape index: {}]
  %s8 = sld [smem:[#allocation0]]
  $region46: #{bilstm_attention_forward.1} parent=0
    _
  %s10 = ssub.s32 1, %s8
  %s11 = scalar_select 0, %s10, %s8
  $region1: #{bilstm_attention_forward.1} parent=0
    #allocation3 [shape = 'u8[512]{0}', space=smem, size = 0x200, scoped, tag = 'input window, operand 0, single buffered']
    #allocation4 [shape = 's32[1]{0}', space=sflag, size = 0x4, scoped, tag = 'scoped memory for bilstm_attention_forward.1']
    #allocation5 [shape = 's32[1]{0}', space=sflag, size = 0x4, scoped, tag = 'scoped memory for bilstm_attention_forward.1']
    #allocation6 [shape = 'u8[51200]{0}', space=vmem, size = 0xc800, scoped, tag = 'input window, operand 1, single buffered']
    %12 = vsyncpa [#allocation5], 0
    %13 = vsyncpa [#allocation4], 0
    // Predicated region
    $region2: #{bilstm_attention_forward.1} parent=1 // pred_check
      _
    $region3: #{bilstm_attention_forward.1} parent=1 // pred_check_branch
      %15 = sbr.rel (0) target = $region5
    $region4: #{bilstm_attention_forward.1} parent=1 // pred_region
      %s17 = ssub.s32 16, 16
      %18 = vsyncadd [#allocation5], %s17
      %s20 = sshll.u32 %s0, 4
      %s21 = int_to_ptr.vmem [resolvable:$true] %s20
      %23 = dma.vmem_to_smem %s21, 16, [#allocation3], [#allocation5]
    $region5: #{bilstm_attention_forward.1} parent=1 // pred_fallthru
      _
    // Predicated region
    $region6: #{bilstm_attention_forward.1} parent=1 // pred_check
      _
    $region7: #{bilstm_attention_forward.1} parent=1 // pred_check_branch
      %25 = sbr.rel (0) target = $region9
    $region8: #{bilstm_attention_forward.1} parent=1 // pred_region
      %s27 = ssub.s32 1600, 1600
      %28 = vsyncadd [#allocation4], %s27
      %s29 = sshll.u32 [#allocation6], 4
      %s30 = int_to_ptr.vmem [resolvable:$true] %s29
      %35 = dma.hbm_to_vmem [thread:$0]  %s1, 1600, %s30, [#allocation4], 32, 32, 2
    $region9: #{bilstm_attention_forward.1} parent=1 // pred_fallthru
      _
    // Predicated region
    $region10: #{bilstm_attention_forward.1} parent=1 // pred_check
      _
    $region11: #{bilstm_attention_forward.1} parent=1 // pred_check_branch
      %37 = sbr.rel (0) target = $region13
    $region12: #{bilstm_attention_forward.1} parent=1 // pred_region
      _
    $region13: #{bilstm_attention_forward.1} parent=1 // pred_fallthru
      _
    // Predicated region
    $region14: #{bilstm_attention_forward.1} parent=1 // pred_check
      _
    $region15: #{bilstm_attention_forward.1} parent=1 // pred_check_branch
      %39 = sbr.rel (0) target = $region17
    $region16: #{bilstm_attention_forward.1} parent=1 // pred_region
      _
    $region17: #{bilstm_attention_forward.1} parent=1 // pred_fallthru
      _
    // Predicated region
    $region18: #{bilstm_attention_forward.1} parent=1 // pred_check
      _
    $region19: #{bilstm_attention_forward.1} parent=1 // pred_check_branch
      %41 = sbr.rel (0) target = $region21
    $region20: #{bilstm_attention_forward.1} parent=1 // pred_region
      _
    $region21: #{bilstm_attention_forward.1} parent=1 // pred_fallthru
      _
    // Predicated region
    $region22: #{bilstm_attention_forward.1} parent=1 // pred_check
      _
    $region23: #{bilstm_attention_forward.1} parent=1 // pred_check_branch
      %43 = sbr.rel (0) target = $region25
    $region24: #{bilstm_attention_forward.1} parent=1 // pred_region
      _
    $region25: #{bilstm_attention_forward.1} parent=1 // pred_fallthru
      _
    // Predicated region
    $region26: #{bilstm_attention_forward.1} parent=1 // pred_check
      _
    $region27: #{bilstm_attention_forward.1} parent=1 // pred_check_branch
      %45 = sbr.rel (0) target = $region29
    $region28: #{bilstm_attention_forward.1} parent=1 // pred_region
      _
    $region29: #{bilstm_attention_forward.1} parent=1 // pred_fallthru
      _
    // Predicated region
    $region30: #{bilstm_attention_forward.1} parent=1 // pred_check
      _
    $region31: #{bilstm_attention_forward.1} parent=1 // pred_check_branch
      %47 = sbr.rel (0) target = $region33
    $region32: #{bilstm_attention_forward.1} parent=1 // pred_region
      %48 = dma.done [#allocation5], 16
    $region33: #{bilstm_attention_forward.1} parent=1 // pred_fallthru
      _
    // Predicated region
    $region34: #{bilstm_attention_forward.1} parent=1 // pred_check
      _
    $region35: #{bilstm_attention_forward.1} parent=1 // pred_check_branch
      %50 = sbr.rel (0) target = $region37
    $region36: #{bilstm_attention_forward.1} parent=1 // pred_region
      %51 = dma.done [#allocation4], 1600
    $region37: #{bilstm_attention_forward.1} parent=1 // pred_fallthru
      _
    %52 = sfence
    %53 = vst [vmem:[#allocation2] sm:$0xff] 0.0
    %54 = vst [vmem:[#allocation2 + $0x8] sm:$0xff] 0.0
    %55 = vst [vmem:[#allocation2 + $0x10] sm:$0xff] 0.0
    %56 = vst [vmem:[#allocation2 + $0x18] sm:$0xff] 0.0
    %57 = vst [vmem:[#allocation2 + $0x20] sm:$0xff] 0.0
    %58 = vst [vmem:[#allocation2 + $0x28] sm:$0xff] 0.0
    %59 = vst [vmem:[#allocation2 + $0x30] sm:$0xff] 0.0
    %60 = vst [vmem:[#allocation2 + $0x38] sm:$0xff] 0.0
    %61 = vst [vmem:[#allocation2 + $0x40] sm:$0xff] 0.0
    %62 = vst [vmem:[#allocation2 + $0x48] sm:$0xff] 0.0
    %63 = vst [vmem:[#allocation2 + $0x50] sm:$0xff] 0.0
    %64 = vst [vmem:[#allocation2 + $0x58] sm:$0xff] 0.0
    %65 = vst [vmem:[#allocation2 + $0x60] sm:$0xff] 0.0
    %66 = vst [vmem:[#allocation2 + $0x68] sm:$0xff] 0.0
    %67 = vst [vmem:[#allocation2 + $0x70] sm:$0xff] 0.0
    %68 = vst [vmem:[#allocation2 + $0x78] sm:$0xff] 0.0
    %s69 = sld [smem:[#allocation3]]
    %s70 = smul.u32 %s69, 2
    %s71 = scalar_lea.vmem [#allocation6], %s70
    %v72 = vld [vmem:[%s71] sm:$0x3]
    %v73 = vlaneseq
    %vm74 = vcmp.ge.s32.totalorder %v73, 0
    %vm75 = vcmp.lt.s32.totalorder %v73, 256
    %vm76 = vmand %vm74, %vm75
    %77 = vst.msk [vmem:[#allocation2] ss:$8 sm:$0x3] %vm76, %v72
    %78 = vst.msk [vmem:[#allocation2] ss:$8 sm:$0x0] %vm76, %v72
    %s79 = sld [smem:[#allocation3 + $0x1]]
    %s80 = smul.u32 %s79, 2
    %s81 = scalar_lea.vmem [#allocation6], %s80
    %v82 = vld [vmem:[%s81] sm:$0x3]
    %s83 = scalar_lea.vmem [#allocation2], 16
    %84 = vst.msk [vmem:[%s83] ss:$8 sm:$0x3] %vm76, %v82
    %85 = vst.msk [vmem:[%s83] ss:$8 sm:$0x0] %vm76, %v82
    %s86 = sld [smem:[#allocation3 + $0x2]]
    %s87 = smul.u32 %s86, 2
    %s88 = scalar_lea.vmem [#allocation6], %s87
    %v89 = vld [vmem:[%s88] sm:$0x3]
    %s90 = scalar_lea.vmem [#allocation2], 32
    %91 = vst.msk [vmem:[%s90] ss:$8 sm:$0x3] %vm76, %v89
    %92 = vst.msk [vmem:[%s90] ss:$8 sm:$0x0] %vm76, %v89
    %s93 = sld [smem:[#allocation3 + $0x3]]
    %s94 = smul.u32 %s93, 2
    %s95 = scalar_lea.vmem [#allocation6], %s94
    %v96 = vld [vmem:[%s95] sm:$0x3]
    %s97 = scalar_lea.vmem [#allocation2], 48
    %98 = vst.msk [vmem:[%s97] ss:$8 sm:$0x3] %vm76, %v96
    %99 = vst.msk [vmem:[%s97] ss:$8 sm:$0x0] %vm76, %v96
    %s100 = sld [smem:[#allocation3 + $0x4]]
    %s101 = smul.u32 %s100, 2
    %s102 = scalar_lea.vmem [#allocation6], %s101
    %v103 = vld [vmem:[%s102] sm:$0x3]
    %s104 = scalar_lea.vmem [#allocation2], 64
    %105 = vst.msk [vmem:[%s104] ss:$8 sm:$0x3] %vm76, %v103
    %106 = vst.msk [vmem:[%s104] ss:$8 sm:$0x0] %vm76, %v103
    %s107 = sld [smem:[#allocation3 + $0x5]]
    %s108 = smul.u32 %s107, 2
    %s109 = scalar_lea.vmem [#allocation6], %s108
    %v110 = vld [vmem:[%s109] sm:$0x3]
    %s111 = scalar_lea.vmem [#allocation2], 80
    %112 = vst.msk [vmem:[%s111] ss:$8 sm:$0x3] %vm76, %v110
    %113 = vst.msk [vmem:[%s111] ss:$8 sm:$0x0] %vm76, %v110
    %s114 = sld [smem:[#allocation3 + $0x6]]
    %s115 = smul.u32 %s114, 2
    %s116 = scalar_lea.vmem [#allocation6], %s115
    %v117 = vld [vmem:[%s116] sm:$0x3]
    %s118 = scalar_lea.vmem [#allocation2], 96
    %119 = vst.msk [vmem:[%s118] ss:$8 sm:$0x3] %vm76, %v117
    %120 = vst.msk [vmem:[%s118] ss:$8 sm:$0x0] %vm76, %v117
    %s121 = sld [smem:[#allocation3 + $0x7]]
    %s122 = smul.u32 %s121, 2
    %s123 = scalar_lea.vmem [#allocation6], %s122
    %v124 = vld [vmem:[%s123] sm:$0x3]
    %s125 = scalar_lea.vmem [#allocation2], 112
    %126 = vst.msk [vmem:[%s125] ss:$8 sm:$0x3] %vm76, %v124
    %127 = vst.msk [vmem:[%s125] ss:$8 sm:$0x0] %vm76, %v124
    %s128 = sld [smem:[#allocation3 + $0x8]]
    %s129 = smul.u32 %s128, 2
    %s130 = scalar_lea.vmem [#allocation6], %s129
    %v131 = vld [vmem:[%s130] sm:$0x3]
    %s132 = scalar_lea.vmem [#allocation2], 1
    %133 = vst.msk [vmem:[%s132] ss:$8 sm:$0x3] %vm76, %v131
    %134 = vst.msk [vmem:[%s132] ss:$8 sm:$0x0] %vm76, %v131
    %s135 = sld [smem:[#allocation3 + $0x9]]
    %s136 = smul.u32 %s135, 2
    %s137 = scalar_lea.vmem [#allocation6], %s136
    %v138 = vld [vmem:[%s137] sm:$0x3]
    %s139 = scalar_lea.vmem [#allocation2], 17
    %140 = vst.msk [vmem:[%s139] ss:$8 sm:$0x3] %vm76, %v138
    %141 = vst.msk [vmem:[%s139] ss:$8 sm:$0x0] %vm76, %v138
    %s142 = sld [smem:[#allocation3 + $0xa]]
    %s143 = smul.u32 %s142, 2
    %s144 = scalar_lea.vmem [#allocation6], %s143
    %v145 = vld [vmem:[%s144] sm:$0x3]
    %s146 = scalar_lea.vmem [#allocation2], 33
    %147 = vst.msk [vmem:[%s146] ss:$8 sm:$0x3] %vm76, %v145
    %148 = vst.msk [vmem:[%s146] ss:$8 sm:$0x0] %vm76, %v145
    %s149 = sld [smem:[#allocation3 + $0xb]]
    %s150 = smul.u32 %s149, 2
    %s151 = scalar_lea.vmem [#allocation6], %s150
    %v152 = vld [vmem:[%s151] sm:$0x3]
    %s153 = scalar_lea.vmem [#allocation2], 49
    %154 = vst.msk [vmem:[%s153] ss:$8 sm:$0x3] %vm76, %v152
    %155 = vst.msk [vmem:[%s153] ss:$8 sm:$0x0] %vm76, %v152
    %s156 = sld [smem:[#allocation3 + $0xc]]
    %s157 = smul.u32 %s156, 2
    %s158 = scalar_lea.vmem [#allocation6], %s157
    %v159 = vld [vmem:[%s158] sm:$0x3]
    %s160 = scalar_lea.vmem [#allocation2], 65
    %161 = vst.msk [vmem:[%s160] ss:$8 sm:$0x3] %vm76, %v159
    %162 = vst.msk [vmem:[%s160] ss:$8 sm:$0x0] %vm76, %v159
    %s163 = sld [smem:[#allocation3 + $0xd]]
    %s164 = smul.u32 %s163, 2
    %s165 = scalar_lea.vmem [#allocation6], %s164
    %v166 = vld [vmem:[%s165] sm:$0x3]
    %s167 = scalar_lea.vmem [#allocation2], 81
    %168 = vst.msk [vmem:[%s167] ss:$8 sm:$0x3] %vm76, %v166
    %169 = vst.msk [vmem:[%s167] ss:$8 sm:$0x0] %vm76, %v166
    %s170 = sld [smem:[#allocation3 + $0xe]]
    %s171 = smul.u32 %s170, 2
    %s172 = scalar_lea.vmem [#allocation6], %s171
    %v173 = vld [vmem:[%s172] sm:$0x3]
    %s174 = scalar_lea.vmem [#allocation2], 97
    %175 = vst.msk [vmem:[%s174] ss:$8 sm:$0x3] %vm76, %v173
    %176 = vst.msk [vmem:[%s174] ss:$8 sm:$0x0] %vm76, %v173
    %s177 = sld [smem:[#allocation3 + $0xf]]
    %s178 = smul.u32 %s177, 2
    %s179 = scalar_lea.vmem [#allocation6], %s178
    %v180 = vld [vmem:[%s179] sm:$0x3]
    %s181 = scalar_lea.vmem [#allocation2], 113
    %182 = vst.msk [vmem:[%s181] ss:$8 sm:$0x3] %vm76, %v180
    %183 = vst.msk [vmem:[%s181] ss:$8 sm:$0x0] %vm76, %v180
    %v184 = vld [vmem:[%s2] sm:$0xff]
    %v185 = vld [vmem:[%s2 + $0x8] sm:$0xff]
    %v186 = vld [vmem:[%s2 + $0x10] sm:$0xff]
    %v187 = vld [vmem:[%s2 + $0x18] sm:$0xff]
    %v188 = vld [vmem:[%s3] sm:$0xff]
    %v189 = vld [vmem:[%s3 + $0x8] sm:$0xff]
    %v190 = vld [vmem:[%s3 + $0x10] sm:$0xff]
    %v191 = vld [vmem:[%s3 + $0x18] sm:$0xff]
    %v192 = vlaneseq
    %v193 = vand.u32 %v192, 127
    %vm194 = vcmp.ge.s32.totalorder %v193, 64
    %vm195 = vcmp.lt.s32.totalorder %v193, 96
    %vm196 = vmand %vm194, %vm195
    %v197 = vld [vmem:[#allocation2] sm:$0xff]
    %vm198 = vcmask 261120
    %v200 = vsel %vm198, 0.0, 0
    %202 = vmatprep.subr.mxu0 0.0
    %203 = vmatpush1.msra.mxu0 0.0
    %204 = vmatprep.subr.mxu0 0.0
    %205 = vmatpush1.msra.mxu0 0.0
    %206 = vmatprep.subr.mxu0 0.0
    %207 = vmatpush1.msra.mxu0 0.0
    %208 = vmatprep.subr.mxu0 0.0
    %209 = vmatpush1.msra.mxu0 0.0
    %210 = vmatprep.subr.mxu0 0.0
    %211 = vmatpush1.msra.mxu0 0.0
    %212 = vmatprep.subr.mxu0 0.0
    %213 = vmatpush1.msra.mxu0 0.0
    %214 = vmatprep.subr.mxu0 0.0
    %215 = vmatpush1.msra.mxu0 0.0
    %216 = vmatprep.subr.mxu0 0.0
    %217 = vmatpush1.msra.mxu0 0.0
    %218 = vmatprep.subr.mxu0 0.0
    %219 = vmatpush1.msra.mxu0 0.0
    %220 = vmatprep.subr.mxu0 0.0
    %221 = vmatpush1.msra.mxu0 0.0
    %222 = vmatprep.subr.mxu0 0.0
    %223 = vmatpush1.msra.mxu0 0.0
    %224 = vmatprep.subr.mxu0 0.0
    %225 = vmatpush1.msra.mxu0 0.0
    %226 = vmatprep.subr.mxu0 0.0
    %227 = vmatpush1.msra.mxu0 %v187
    %228 = vmatprep.subr.mxu0 0.0
    %229 = vmatpush1.msra.mxu0 %v186
    %230 = vmatprep.subr.mxu0 0.0
    %231 = vmatpush1.msra.mxu0 %v185
    %232 = vmatprep.subr.mxu0 0.0
    %233 = vmatpush1.msra.mxu0 %v184
    %234 = vmatprep.subr.mxu0 0.0
    %235 = vmatpush2.msra.mxu0 0.0
    %236 = vmatprep.subr.mxu0 0.0
    %237 = vmatpush2.msra.mxu0 0.0
    %238 = vmatprep.subr.mxu0 0.0
    %239 = vmatpush2.msra.mxu0 0.0
    %240 = vmatprep.subr.mxu0 0.0
    %241 = vmatpush2.msra.mxu0 0.0
    %242 = vmatprep.subr.mxu0 0.0
    %243 = vmatpush2.msra.mxu0 0.0
    %244 = vmatprep.subr.mxu0 0.0
    %245 = vmatpush2.msra.mxu0 0.0
    %246 = vmatprep.subr.mxu0 0.0
    %247 = vmatpush2.msra.mxu0 0.0
    %248 = vmatprep.subr.mxu0 0.0
    %249 = vmatpush2.msra.mxu0 0.0
    %250 = vmatprep.subr.mxu0 0.0
    %251 = vmatpush2.msra.mxu0 0.0
    %252 = vmatprep.subr.mxu0 0.0
    %253 = vmatpush2.msra.mxu0 0.0
    %254 = vmatprep.subr.mxu0 0.0
    %255 = vmatpush2.msra.mxu0 0.0
    %256 = vmatprep.subr.mxu0 0.0
    %257 = vmatpush2.msra.mxu0 0.0
    %258 = vmatprep.subr.mxu0 0.0
    %259 = vmatpush2.msra.mxu0 0.0
    %260 = vmatprep.subr.mxu0 0.0
    %261 = vmatpush2.msra.mxu0 0.0
    %262 = vmatprep.subr.mxu0 0.0
    %263 = vmatpush2.msra.mxu0 0.0
    %264 = vmatprep.subr.mxu0 0.0
    %265 = vmatpush2.msra.mxu0 0.0
    %266 = vmatprep.mubr.f32.mxu0 0.0
    %267 = vmatmul.mubr.f32.gmra.mxu0 %v200
    %v268 = vpop.f32.mrf.mxu0
    %v269 = vadd.f32 0.0, %v268
    %v270 = vpop.f32.mrf.mxu0
    %271 = vdwg.mxu0
    %v272 = vadd.f32 %v197, %v269
    %v273 = vld [vmem:[#allocation2 + $0x78] sm:$0xff]
    %274 = vmatprep.subr.mxu0 0.0
    %275 = vmatpush1.msra.mxu0 0.0
    %276 = vmatprep.subr.mxu0 0.0
    %277 = vmatpush1.msra.mxu0 0.0
    %278 = vmatprep.subr.mxu0 0.0
    %279 = vmatpush1.msra.mxu0 0.0
    %280 = vmatprep.subr.mxu0 0.0
    %281 = vmatpush1.msra.mxu0 0.0
    %282 = vmatprep.subr.mxu0 0.0
    %283 = vmatpush1.msra.mxu0 0.0
    %284 = vmatprep.subr.mxu0 0.0
    %285 = vmatpush1.msra.mxu0 0.0
    %286 = vmatprep.subr.mxu0 0.0
    %287 = vmatpush1.msra.mxu0 0.0
    %288 = vmatprep.subr.mxu0 0.0
    %289 = vmatpush1.msra.mxu0 0.0
    %290 = vmatprep.subr.mxu0 0.0
    %291 = vmatpush1.msra.mxu0 0.0
    %292 = vmatprep.subr.mxu0 0.0
    %293 = vmatpush1.msra.mxu0 0.0
    %294 = vmatprep.subr.mxu0 0.0
    %295 = vmatpush1.msra.mxu0 0.0
    %296 = vmatprep.subr.mxu0 0.0
    %297 = vmatpush1.msra.mxu0 0.0
    %298 = vmatprep.subr.mxu0 0.0
    %299 = vmatpush1.msra.mxu0 %v191
    %300 = vmatprep.subr.mxu0 0.0
    %301 = vmatpush1.msra.mxu0 %v190
    %302 = vmatprep.subr.mxu0 0.0
    %303 = vmatpush1.msra.mxu0 %v189
    %304 = vmatprep.subr.mxu0 0.0
    %305 = vmatpush1.msra.mxu0 %v188
    %306 = vmatprep.subr.mxu0 0.0
    %307 = vmatpush2.msra.mxu0 0.0
    %308 = vmatprep.subr.mxu0 0.0
    %309 = vmatpush2.msra.mxu0 0.0
    %310 = vmatprep.subr.mxu0 0.0
    %311 = vmatpush2.msra.mxu0 0.0
    %312 = vmatprep.subr.mxu0 0.0
    %313 = vmatpush2.msra.mxu0 0.0
    %314 = vmatprep.subr.mxu0 0.0
    %315 = vmatpush2.msra.mxu0 0.0
    %316 = vmatprep.subr.mxu0 0.0
    %317 = vmatpush2.msra.mxu0 0.0
    %318 = vmatprep.subr.mxu0 0.0
    %319 = vmatpush2.msra.mxu0 0.0
    %320 = vmatprep.subr.mxu0 0.0
    %321 = vmatpush2.msra.mxu0 0.0
    %322 = vmatprep.subr.mxu0 0.0
    %323 = vmatpush2.msra.mxu0 0.0
    %324 = vmatprep.subr.mxu0 0.0
    %325 = vmatpush2.msra.mxu0 0.0
    %326 = vmatprep.subr.mxu0 0.0
    %327 = vmatpush2.msra.mxu0 0.0
    %328 = vmatprep.subr.mxu0 0.0
    %329 = vmatpush2.msra.mxu0 0.0
    %330 = vmatprep.subr.mxu0 0.0
    %331 = vmatpush2.msra.mxu0 0.0
    %332 = vmatprep.subr.mxu0 0.0
    %333 = vmatpush2.msra.mxu0 0.0
    %334 = vmatprep.subr.mxu0 0.0
    %335 = vmatpush2.msra.mxu0 0.0
    %336 = vmatprep.subr.mxu0 0.0
    %337 = vmatpush2.msra.mxu0 0.0
    %338 = vmatprep.mubr.f32.mxu0 0.0
    %339 = vmatmul.mubr.f32.gmra.mxu0 %v200
    %v340 = vpop.f32.mrf.mxu0
    %v341 = vadd.f32 0.0, %v340
    %v342 = vpop.f32.mrf.mxu0
    %343 = vdwg.mxu0
    %v344 = vadd.f32 %v273, %v341
    %v345 = vtanh.pop %v272
    %v346 = vxor.u32 %v272, 2147483648
    %v347 = vmul.f32 %v346, 1.442695
    %v348 = vpow.pop %v347
    %v349 = vadd.f32 %v348, 1.0
    %v350 = vrcp.pop %v349
    %v351 = vmul.f32 1.0, %v350
    %v352 = vsel %vm196, %v345, %v351
    %v353 = vmul.f32 %v352, 0.0
    %355 = vrot.lane.b32.xlu0 %v352, 64
    %v356 = vpop.permute.xlu0 %355
    %v358 = vmul.f32 %v352, %v356
    %360 = vrot.lane.b32.xlu0 %v358, 32
    %v361 = vpop.permute.xlu0 %360
    %v363 = vadd.f32 %v353, %v361
    %v364 = vtanh.pop %v363
    %366 = vrot.lane.b32.xlu0 %v364, 64
    %v367 = vpop.permute.xlu0 %366
    %v369 = vmul.f32 %v352, %v367
    %v370 = vtanh.pop %v344
    %v371 = vxor.u32 %v344, 2147483648
    %v372 = vmul.f32 %v371, 1.442695
    %v373 = vpow.pop %v372
    %v374 = vadd.f32 %v373, 1.0
    %v375 = vrcp.pop %v374
    %v376 = vmul.f32 1.0, %v375
    %v377 = vsel %vm196, %v370, %v376
    %v378 = vmul.f32 %v377, 0.0
    %380 = vrot.lane.b32.xlu0 %v377, 64
    %v381 = vpop.permute.xlu0 %380
    %v383 = vmul.f32 %v377, %v381
    %385 = vrot.lane.b32.xlu0 %v383, 32
    %v386 = vpop.permute.xlu0 %385
    %v388 = vadd.f32 %v378, %v386
    %v389 = vtanh.pop %v388
    %391 = vrot.lane.b32.xlu0 %v389, 64
    %v392 = vpop.permute.xlu0 %391
    %v394 = vmul.f32 %v377, %v392
    %v395 = vld [vmem:[#allocation2 + $0x10] sm:$0xff]
    %397 = vrot.lane.b32.xlu0 %v369, 32
    %v398 = vpop.permute.xlu0 %397
    %v399 = vsel %vm198, %v398, 0
    %401 = vmatprep.subr.mxu0 0.0
    %402 = vmatpush1.msra.mxu0 0.0
    %403 = vmatprep.subr.mxu0 0.0
    %404 = vmatpush1.msra.mxu0 0.0
    %405 = vmatprep.subr.mxu0 0.0
    %406 = vmatpush1.msra.mxu0 0.0
    %407 = vmatprep.subr.mxu0 0.0
    %408 = vmatpush1.msra.mxu0 0.0
    %409 = vmatprep.subr.mxu0 0.0
    %410 = vmatpush1.msra.mxu0 0.0
    %411 = vmatprep.subr.mxu0 0.0
    %412 = vmatpush1.msra.mxu0 0.0
    %413 = vmatprep.subr.mxu0 0.0
    %414 = vmatpush1.msra.mxu0 0.0
    %415 = vmatprep.subr.mxu0 0.0
    %416 = vmatpush1.msra.mxu0 0.0
    %417 = vmatprep.subr.mxu0 0.0
    %418 = vmatpush1.msra.mxu0 0.0
    %419 = vmatprep.subr.mxu0 0.0
    %420 = vmatpush1.msra.mxu0 0.0
    %421 = vmatprep.subr.mxu0 0.0
    %422 = vmatpush1.msra.mxu0 0.0
    %423 = vmatprep.subr.mxu0 0.0
    %424 = vmatpush1.msra.mxu0 0.0
    %425 = vmatprep.subr.mxu0 0.0
    %426 = vmatpush1.msra.mxu0 %v187
    %427 = vmatprep.subr.mxu0 0.0
    %428 = vmatpush1.msra.mxu0 %v186
    %429 = vmatprep.subr.mxu0 0.0
    %430 = vmatpush1.msra.mxu0 %v185
    %431 = vmatprep.subr.mxu0 0.0
    %432 = vmatpush1.msra.mxu0 %v184
    %433 = vmatprep.subr.mxu0 0.0
    %434 = vmatpush2.msra.mxu0 0.0
    %435 = vmatprep.subr.mxu0 0.0
    %436 = vmatpush2.msra.mxu0 0.0
    %437 = vmatprep.subr.mxu0 0.0
    %438 = vmatpush2.msra.mxu0 0.0
    %439 = vmatprep.subr.mxu0 0.0
    %440 = vmatpush2.msra.mxu0 0.0
    %441 = vmatprep.subr.mxu0 0.0
    %442 = vmatpush2.msra.mxu0 0.0
    %443 = vmatprep.subr.mxu0 0.0
    %444 = vmatpush2.msra.mxu0 0.0
    %445 = vmatprep.subr.mxu0 0.0
    %446 = vmatpush2.msra.mxu0 0.0
    %447 = vmatprep.subr.mxu0 0.0
    %448 = vmatpush2.msra.mxu0 0.0
    %449 = vmatprep.subr.mxu0 0.0
    %450 = vmatpush2.msra.mxu0 0.0
    %451 = vmatprep.subr.mxu0 0.0
    %452 = vmatpush2.msra.mxu0 0.0
    %453 = vmatprep.subr.mxu0 0.0
    %454 = vmatpush2.msra.mxu0 0.0
    %455 = vmatprep.subr.mxu0 0.0
    %456 = vmatpush2.msra.mxu0 0.0
    %457 = vmatprep.subr.mxu0 0.0
    %458 = vmatpush2.msra.mxu0 0.0
    %459 = vmatprep.subr.mxu0 0.0
    %460 = vmatpush2.msra.mxu0 0.0
    %461 = vmatprep.subr.mxu0 0.0
    %462 = vmatpush2.msra.mxu0 0.0
    %463 = vmatprep.subr.mxu0 0.0
    %464 = vmatpush2.msra.mxu0 0.0
    %465 = vmatprep.mubr.f32.mxu0 0.0
    %466 = vmatmul.mubr.f32.gmra.mxu0 %v399
    %v467 = vpop.f32.mrf.mxu0
    %v468 = vadd.f32 0.0, %v467
    %v469 = vpop.f32.mrf.mxu0
    %470 = vdwg.mxu0
    %v471 = vadd.f32 %v395, %v468
    %v472 = vld [vmem:[#allocation2 + $0x68] sm:$0xff]
    %474 = vrot.lane.b32.xlu0 %v394, 32
    %v475 = vpop.permute.xlu0 %474
    %v476 = vsel %vm198, %v475, 0
    %478 = vmatprep.subr.mxu0 0.0
    %479 = vmatpush1.msra.mxu0 0.0
    %480 = vmatprep.subr.mxu0 0.0
    %481 = vmatpush1.msra.mxu0 0.0
    %482 = vmatprep.subr.mxu0 0.0
    %483 = vmatpush1.msra.mxu0 0.0
    %484 = vmatprep.subr.mxu0 0.0
    %485 = vmatpush1.msra.mxu0 0.0
    %486 = vmatprep.subr.mxu0 0.0
    %487 = vmatpush1.msra.mxu0 0.0
    %488 = vmatprep.subr.mxu0 0.0
    %489 = vmatpush1.msra.mxu0 0.0
    %490 = vmatprep.subr.mxu0 0.0
    %491 = vmatpush1.msra.mxu0 0.0
    %492 = vmatprep.subr.mxu0 0.0
    %493 = vmatpush1.msra.mxu0 0.0
    %494 = vmatprep.subr.mxu0 0.0
    %495 = vmatpush1.msra.mxu0 0.0
    %496 = vmatprep.subr.mxu0 0.0
    %497 = vmatpush1.msra.mxu0 0.0
    %498 = vmatprep.subr.mxu0 0.0
    %499 = vmatpush1.msra.mxu0 0.0
    %500 = vmatprep.subr.mxu0 0.0
    %501 = vmatpush1.msra.mxu0 0.0
    %502 = vmatprep.subr.mxu0 0.0
    %503 = vmatpush1.msra.mxu0 %v191
    %504 = vmatprep.subr.mxu0 0.0
    %505 = vmatpush1.msra.mxu0 %v190
    %506 = vmatprep.subr.mxu0 0.0
    %507 = vmatpush1.msra.mxu0 %v189
    %508 = vmatprep.subr.mxu0 0.0
    %509 = vmatpush1.msra.mxu0 %v188
    %510 = vmatprep.subr.mxu0 0.0
    %511 = vmatpush2.msra.mxu0 0.0
    %512 = vmatprep.subr.mxu0 0.0
    %513 = vmatpush2.msra.mxu0 0.0
    %514 = vmatprep.subr.mxu0 0.0
    %515 = vmatpush2.msra.mxu0 0.0
    %516 = vmatprep.subr.mxu0 0.0
    %517 = vmatpush2.msra.mxu0 0.0
    %518 = vmatprep.subr.mxu0 0.0
    %519 = vmatpush2.msra.mxu0 0.0
    %520 = vmatprep.subr.mxu0 0.0
    %521 = vmatpush2.msra.mxu0 0.0
    %522 = vmatprep.subr.mxu0 0.0
    %523 = vmatpush2.msra.mxu0 0.0
    %524 = vmatprep.subr.mxu0 0.0
    %525 = vmatpush2.msra.mxu0 0.0
    %526 = vmatprep.subr.mxu0 0.0
    %527 = vmatpush2.msra.mxu0 0.0
    %528 = vmatprep.subr.mxu0 0.0
    %529 = vmatpush2.msra.mxu0 0.0
    %530 = vmatprep.subr.mxu0 0.0
    %531 = vmatpush2.msra.mxu0 0.0
    %532 = vmatprep.subr.mxu0 0.0
    %533 = vmatpush2.msra.mxu0 0.0
    %534 = vmatprep.subr.mxu0 0.0
    %535 = vmatpush2.msra.mxu0 0.0
    %536 = vmatprep.subr.mxu0 0.0
    %537 = vmatpush2.msra.mxu0 0.0
    %538 = vmatprep.subr.mxu0 0.0
    %539 = vmatpush2.msra.mxu0 0.0
    %540 = vmatprep.subr.mxu0 0.0
    %541 = vmatpush2.msra.mxu0 0.0
    %542 = vmatprep.mubr.f32.mxu0 0.0
    %543 = vmatmul.mubr.f32.gmra.mxu0 %v476
    %v544 = vpop.f32.mrf.mxu0
    %v545 = vadd.f32 0.0, %v544
    %v546 = vpop.f32.mrf.mxu0
    %547 = vdwg.mxu0
    %v548 = vadd.f32 %v472, %v545
    %v549 = vtanh.pop %v471
    %v550 = vxor.u32 %v471, 2147483648
    %v551 = vmul.f32 %v550, 1.442695
    %v552 = vpow.pop %v551
    %v553 = vadd.f32 %v552, 1.0
    %v554 = vrcp.pop %v553
    %v555 = vmul.f32 1.0, %v554
    %v556 = vsel %vm196, %v549, %v555
    %v557 = vmul.f32 %v556, %v363
    %559 = vrot.lane.b32.xlu0 %v556, 64
    %v560 = vpop.permute.xlu0 %559
    %v562 = vmul.f32 %v556, %v560
    %564 = vrot.lane.b32.xlu0 %v562, 32
    %v565 = vpop.permute.xlu0 %564
    %v567 = vadd.f32 %v557, %v565
    %v568 = vtanh.pop %v567
    %570 = vrot.lane.b32.xlu0 %v568, 64
    %v571 = vpop.permute.xlu0 %570
    %v573 = vmul.f32 %v556, %v571
    %v574 = vtanh.pop %v548
    %v575 = vxor.u32 %v548, 2147483648
    %v576 = vmul.f32 %v575, 1.442695
    %v577 = vpow.pop %v576
    %v578 = vadd.f32 %v577, 1.0
    %v579 = vrcp.pop %v578
    %v580 = vmul.f32 1.0, %v579
    %v581 = vsel %vm196, %v574, %v580
    %v582 = vmul.f32 %v581, %v388
    %584 = vrot.lane.b32.xlu0 %v581, 64
    %v585 = vpop.permute.xlu0 %584
    %v587 = vmul.f32 %v581, %v585
    %589 = vrot.lane.b32.xlu0 %v587, 32
    %v590 = vpop.permute.xlu0 %589
    %v592 = vadd.f32 %v582, %v590
    %v593 = vtanh.pop %v592
    %595 = vrot.lane.b32.xlu0 %v593, 64
    %v596 = vpop.permute.xlu0 %595
    %v598 = vmul.f32 %v581, %v596
    %v599 = vld [vmem:[#allocation2 + $0x20] sm:$0xff]
    %601 = vrot.lane.b32.xlu0 %v573, 32
    %v602 = vpop.permute.xlu0 %601
    %v603 = vsel %vm198, %v602, 0
    %605 = vmatprep.subr.mxu0 0.0
    %606 = vmatpush1.msra.mxu0 0.0
    %607 = vmatprep.subr.mxu0 0.0
    %608 = vmatpush1.msra.mxu0 0.0
    %609 = vmatprep.subr.mxu0 0.0
    %610 = vmatpush1.msra.mxu0 0.0
    %611 = vmatprep.subr.mxu0 0.0
    %612 = vmatpush1.msra.mxu0 0.0
    %613 = vmatprep.subr.mxu0 0.0
    %614 = vmatpush1.msra.mxu0 0.0
    %615 = vmatprep.subr.mxu0 0.0
    %616 = vmatpush1.msra.mxu0 0.0
    %617 = vmatprep.subr.mxu0 0.0
    %618 = vmatpush1.msra.mxu0 0.0
    %619 = vmatprep.subr.mxu0 0.0
    %620 = vmatpush1.msra.mxu0 0.0
    %621 = vmatprep.subr.mxu0 0.0
    %622 = vmatpush1.msra.mxu0 0.0
    %623 = vmatprep.subr.mxu0 0.0
    %624 = vmatpush1.msra.mxu0 0.0
    %625 = vmatprep.subr.mxu0 0.0
    %626 = vmatpush1.msra.mxu0 0.0
    %627 = vmatprep.subr.mxu0 0.0
    %628 = vmatpush1.msra.mxu0 0.0
    %629 = vmatprep.subr.mxu0 0.0
    %630 = vmatpush1.msra.mxu0 %v187
    %631 = vmatprep.subr.mxu0 0.0
    %632 = vmatpush1.msra.mxu0 %v186
    %633 = vmatprep.subr.mxu0 0.0
    %634 = vmatpush1.msra.mxu0 %v185
    %635 = vmatprep.subr.mxu0 0.0
    %636 = vmatpush1.msra.mxu0 %v184
    %637 = vmatprep.subr.mxu0 0.0
    %638 = vmatpush2.msra.mxu0 0.0
    %639 = vmatprep.subr.mxu0 0.0
    %640 = vmatpush2.msra.mxu0 0.0
    %641 = vmatprep.subr.mxu0 0.0
    %642 = vmatpush2.msra.mxu0 0.0
    %643 = vmatprep.subr.mxu0 0.0
    %644 = vmatpush2.msra.mxu0 0.0
    %645 = vmatprep.subr.mxu0 0.0
    %646 = vmatpush2.msra.mxu0 0.0
    %647 = vmatprep.subr.mxu0 0.0
    %648 = vmatpush2.msra.mxu0 0.0
    %649 = vmatprep.subr.mxu0 0.0
    %650 = vmatpush2.msra.mxu0 0.0
    %651 = vmatprep.subr.mxu0 0.0
    %652 = vmatpush2.msra.mxu0 0.0
    %653 = vmatprep.subr.mxu0 0.0
    %654 = vmatpush2.msra.mxu0 0.0
    %655 = vmatprep.subr.mxu0 0.0
    %656 = vmatpush2.msra.mxu0 0.0
    %657 = vmatprep.subr.mxu0 0.0
    %658 = vmatpush2.msra.mxu0 0.0
    %659 = vmatprep.subr.mxu0 0.0
    %660 = vmatpush2.msra.mxu0 0.0
    %661 = vmatprep.subr.mxu0 0.0
    %662 = vmatpush2.msra.mxu0 0.0
    %663 = vmatprep.subr.mxu0 0.0
    %664 = vmatpush2.msra.mxu0 0.0
    %665 = vmatprep.subr.mxu0 0.0
    %666 = vmatpush2.msra.mxu0 0.0
    %667 = vmatprep.subr.mxu0 0.0
    %668 = vmatpush2.msra.mxu0 0.0
    %669 = vmatprep.mubr.f32.mxu0 0.0
    %670 = vmatmul.mubr.f32.gmra.mxu0 %v603
    %v671 = vpop.f32.mrf.mxu0
    %v672 = vadd.f32 0.0, %v671
    %v673 = vpop.f32.mrf.mxu0
    %674 = vdwg.mxu0
    %v675 = vadd.f32 %v599, %v672
    %v676 = vld [vmem:[#allocation2 + $0x58] sm:$0xff]
    %678 = vrot.lane.b32.xlu0 %v598, 32
    %v679 = vpop.permute.xlu0 %678
    %v680 = vsel %vm198, %v679, 0
    %682 = vmatprep.subr.mxu0 0.0
    %683 = vmatpush1.msra.mxu0 0.0
    %684 = vmatprep.subr.mxu0 0.0
    %685 = vmatpush1.msra.mxu0 0.0
    %686 = vmatprep.subr.mxu0 0.0
    %687 = vmatpush1.msra.mxu0 0.0
    %688 = vmatprep.subr.mxu0 0.0
    %689 = vmatpush1.msra.mxu0 0.0
    %690 = vmatprep.subr.mxu0 0.0
    %691 = vmatpush1.msra.mxu0 0.0
    %692 = vmatprep.subr.mxu0 0.0
    %693 = vmatpush1.msra.mxu0 0.0
    %694 = vmatprep.subr.mxu0 0.0
    %695 = vmatpush1.msra.mxu0 0.0
    %696 = vmatprep.subr.mxu0 0.0
    %697 = vmatpush1.msra.mxu0 0.0
    %698 = vmatprep.subr.mxu0 0.0
    %699 = vmatpush1.msra.mxu0 0.0
    %700 = vmatprep.subr.mxu0 0.0
    %701 = vmatpush1.msra.mxu0 0.0
    %702 = vmatprep.subr.mxu0 0.0
    %703 = vmatpush1.msra.mxu0 0.0
    %704 = vmatprep.subr.mxu0 0.0
    %705 = vmatpush1.msra.mxu0 0.0
    %706 = vmatprep.subr.mxu0 0.0
    %707 = vmatpush1.msra.mxu0 %v191
    %708 = vmatprep.subr.mxu0 0.0
    %709 = vmatpush1.msra.mxu0 %v190
    %710 = vmatprep.subr.mxu0 0.0
    %711 = vmatpush1.msra.mxu0 %v189
    %712 = vmatprep.subr.mxu0 0.0
    %713 = vmatpush1.msra.mxu0 %v188
    %714 = vmatprep.subr.mxu0 0.0
    %715 = vmatpush2.msra.mxu0 0.0
    %716 = vmatprep.subr.mxu0 0.0
    %717 = vmatpush2.msra.mxu0 0.0
    %718 = vmatprep.subr.mxu0 0.0
    %719 = vmatpush2.msra.mxu0 0.0
    %720 = vmatprep.subr.mxu0 0.0
    %721 = vmatpush2.msra.mxu0 0.0
    %722 = vmatprep.subr.mxu0 0.0
    %723 = vmatpush2.msra.mxu0 0.0
    %724 = vmatprep.subr.mxu0 0.0
    %725 = vmatpush2.msra.mxu0 0.0
    %726 = vmatprep.subr.mxu0 0.0
    %727 = vmatpush2.msra.mxu0 0.0
    %728 = vmatprep.subr.mxu0 0.0
    %729 = vmatpush2.msra.mxu0 0.0
    %730 = vmatprep.subr.mxu0 0.0
    %731 = vmatpush2.msra.mxu0 0.0
    %732 = vmatprep.subr.mxu0 0.0
    %733 = vmatpush2.msra.mxu0 0.0
    %734 = vmatprep.subr.mxu0 0.0
    %735 = vmatpush2.msra.mxu0 0.0
    %736 = vmatprep.subr.mxu0 0.0
    %737 = vmatpush2.msra.mxu0 0.0
    %738 = vmatprep.subr.mxu0 0.0
    %739 = vmatpush2.msra.mxu0 0.0
    %740 = vmatprep.subr.mxu0 0.0
    %741 = vmatpush2.msra.mxu0 0.0
    %742 = vmatprep.subr.mxu0 0.0
    %743 = vmatpush2.msra.mxu0 0.0
    %744 = vmatprep.subr.mxu0 0.0
    %745 = vmatpush2.msra.mxu0 0.0
    %746 = vmatprep.mubr.f32.mxu0 0.0
    %747 = vmatmul.mubr.f32.gmra.mxu0 %v680
    %v748 = vpop.f32.mrf.mxu0
    %v749 = vadd.f32 0.0, %v748
    %v750 = vpop.f32.mrf.mxu0
    %751 = vdwg.mxu0
    %v752 = vadd.f32 %v676, %v749
    %v753 = vtanh.pop %v675
    %v754 = vxor.u32 %v675, 2147483648
    %v755 = vmul.f32 %v754, 1.442695
    %v756 = vpow.pop %v755
    %v757 = vadd.f32 %v756, 1.0
    %v758 = vrcp.pop %v757
    %v759 = vmul.f32 1.0, %v758
    %v760 = vsel %vm196, %v753, %v759
    %v761 = vmul.f32 %v760, %v567
    %763 = vrot.lane.b32.xlu0 %v760, 64
    %v764 = vpop.permute.xlu0 %763
    %v766 = vmul.f32 %v760, %v764
    %768 = vrot.lane.b32.xlu0 %v766, 32
    %v769 = vpop.permute.xlu0 %768
    %v771 = vadd.f32 %v761, %v769
    %v772 = vtanh.pop %v771
    %774 = vrot.lane.b32.xlu0 %v772, 64
    %v775 = vpop.permute.xlu0 %774
    %v777 = vmul.f32 %v760, %v775
    %v778 = vtanh.pop %v752
    %v779 = vxor.u32 %v752, 2147483648
    %v780 = vmul.f32 %v779, 1.442695
    %v781 = vpow.pop %v780
    %v782 = vadd.f32 %v781, 1.0
    %v783 = vrcp.pop %v782
    %v784 = vmul.f32 1.0, %v783
    %v785 = vsel %vm196, %v778, %v784
    %v786 = vmul.f32 %v785, %v592
    %788 = vrot.lane.b32.xlu0 %v785, 64
    %v789 = vpop.permute.xlu0 %788
    %v791 = vmul.f32 %v785, %v789
    %793 = vrot.lane.b32.xlu0 %v791, 32
    %v794 = vpop.permute.xlu0 %793
    %v796 = vadd.f32 %v786, %v794
    %v797 = vtanh.pop %v796
    %799 = vrot.lane.b32.xlu0 %v797, 64
    %v800 = vpop.permute.xlu0 %799
    %v802 = vmul.f32 %v785, %v800
    %v803 = vld [vmem:[#allocation2 + $0x30] sm:$0xff]
    %805 = vrot.lane.b32.xlu0 %v777, 32
    %v806 = vpop.permute.xlu0 %805
    %v807 = vsel %vm198, %v806, 0
    %809 = vmatprep.subr.mxu0 0.0
    %810 = vmatpush1.msra.mxu0 0.0
    %811 = vmatprep.subr.mxu0 0.0
    %812 = vmatpush1.msra.mxu0 0.0
    %813 = vmatprep.subr.mxu0 0.0
    %814 = vmatpush1.msra.mxu0 0.0
    %815 = vmatprep.subr.mxu0 0.0
    %816 = vmatpush1.msra.mxu0 0.0
    %817 = vmatprep.subr.mxu0 0.0
    %818 = vmatpush1.msra.mxu0 0.0
    %819 = vmatprep.subr.mxu0 0.0
    %820 = vmatpush1.msra.mxu0 0.0
    %821 = vmatprep.subr.mxu0 0.0
    %822 = vmatpush1.msra.mxu0 0.0
    %823 = vmatprep.subr.mxu0 0.0
    %824 = vmatpush1.msra.mxu0 0.0
    %825 = vmatprep.subr.mxu0 0.0
    %826 = vmatpush1.msra.mxu0 0.0
    %827 = vmatprep.subr.mxu0 0.0
    %828 = vmatpush1.msra.mxu0 0.0
    %829 = vmatprep.subr.mxu0 0.0
    %830 = vmatpush1.msra.mxu0 0.0
    %831 = vmatprep.subr.mxu0 0.0
    %832 = vmatpush1.msra.mxu0 0.0
    %833 = vmatprep.subr.mxu0 0.0
    %834 = vmatpush1.msra.mxu0 %v187
    %835 = vmatprep.subr.mxu0 0.0
    %836 = vmatpush1.msra.mxu0 %v186
    %837 = vmatprep.subr.mxu0 0.0
    %838 = vmatpush1.msra.mxu0 %v185
    %839 = vmatprep.subr.mxu0 0.0
    %840 = vmatpush1.msra.mxu0 %v184
    %841 = vmatprep.subr.mxu0 0.0
    %842 = vmatpush2.msra.mxu0 0.0
    %843 = vmatprep.subr.mxu0 0.0
    %844 = vmatpush2.msra.mxu0 0.0
    %845 = vmatprep.subr.mxu0 0.0
    %846 = vmatpush2.msra.mxu0 0.0
    %847 = vmatprep.subr.mxu0 0.0
    %848 = vmatpush2.msra.mxu0 0.0
    %849 = vmatprep.subr.mxu0 0.0
    %850 = vmatpush2.msra.mxu0 0.0
    %851 = vmatprep.subr.mxu0 0.0
    %852 = vmatpush2.msra.mxu0 0.0
    %853 = vmatprep.subr.mxu0 0.0
    %854 = vmatpush2.msra.mxu0 0.0
    %855 = vmatprep.subr.mxu0 0.0
    %856 = vmatpush2.msra.mxu0 0.0
    %857 = vmatprep.subr.mxu0 0.0
    %858 = vmatpush2.msra.mxu0 0.0
    %859 = vmatprep.subr.mxu0 0.0
    %860 = vmatpush2.msra.mxu0 0.0
    %861 = vmatprep.subr.mxu0 0.0
    %862 = vmatpush2.msra.mxu0 0.0
    %863 = vmatprep.subr.mxu0 0.0
    %864 = vmatpush2.msra.mxu0 0.0
    %865 = vmatprep.subr.mxu0 0.0
    %866 = vmatpush2.msra.mxu0 0.0
    %867 = vmatprep.subr.mxu0 0.0
    %868 = vmatpush2.msra.mxu0 0.0
    %869 = vmatprep.subr.mxu0 0.0
    %870 = vmatpush2.msra.mxu0 0.0
    %871 = vmatprep.subr.mxu0 0.0
    %872 = vmatpush2.msra.mxu0 0.0
    %873 = vmatprep.mubr.f32.mxu0 0.0
    %874 = vmatmul.mubr.f32.gmra.mxu0 %v807
    %v875 = vpop.f32.mrf.mxu0
    %v876 = vadd.f32 0.0, %v875
    %v877 = vpop.f32.mrf.mxu0
    %878 = vdwg.mxu0
    %v879 = vadd.f32 %v803, %v876
    %v880 = vld [vmem:[#allocation2 + $0x48] sm:$0xff]
    %882 = vrot.lane.b32.xlu0 %v802, 32
    %v883 = vpop.permute.xlu0 %882
    %v884 = vsel %vm198, %v883, 0
    %886 = vmatprep.subr.mxu0 0.0
    %887 = vmatpush1.msra.mxu0 0.0
    %888 = vmatprep.subr.mxu0 0.0
    %889 = vmatpush1.msra.mxu0 0.0
    %890 = vmatprep.subr.mxu0 0.0
    %891 = vmatpush1.msra.mxu0 0.0
    %892 = vmatprep.subr.mxu0 0.0
    %893 = vmatpush1.msra.mxu0 0.0
    %894 = vmatprep.subr.mxu0 0.0
    %895 = vmatpush1.msra.mxu0 0.0
    %896 = vmatprep.subr.mxu0 0.0
    %897 = vmatpush1.msra.mxu0 0.0
    %898 = vmatprep.subr.mxu0 0.0
    %899 = vmatpush1.msra.mxu0 0.0
    %900 = vmatprep.subr.mxu0 0.0
    %901 = vmatpush1.msra.mxu0 0.0
    %902 = vmatprep.subr.mxu0 0.0
    %903 = vmatpush1.msra.mxu0 0.0
    %904 = vmatprep.subr.mxu0 0.0
    %905 = vmatpush1.msra.mxu0 0.0
    %906 = vmatprep.subr.mxu0 0.0
    %907 = vmatpush1.msra.mxu0 0.0
    %908 = vmatprep.subr.mxu0 0.0
    %909 = vmatpush1.msra.mxu0 0.0
    %910 = vmatprep.subr.mxu0 0.0
    %911 = vmatpush1.msra.mxu0 %v191
    %912 = vmatprep.subr.mxu0 0.0
    %913 = vmatpush1.msra.mxu0 %v190
    %914 = vmatprep.subr.mxu0 0.0
    %915 = vmatpush1.msra.mxu0 %v189
    %916 = vmatprep.subr.mxu0 0.0
    %917 = vmatpush1.msra.mxu0 %v188
    %918 = vmatprep.subr.mxu0 0.0
    %919 = vmatpush2.msra.mxu0 0.0
    %920 = vmatprep.subr.mxu0 0.0
    %921 = vmatpush2.msra.mxu0 0.0
    %922 = vmatprep.subr.mxu0 0.0
    %923 = vmatpush2.msra.mxu0 0.0
    %924 = vmatprep.subr.mxu0 0.0
    %925 = vmatpush2.msra.mxu0 0.0
    %926 = vmatprep.subr.mxu0 0.0
    %927 = vmatpush2.msra.mxu0 0.0
    %928 = vmatprep.subr.mxu0 0.0
    %929 = vmatpush2.msra.mxu0 0.0
    %930 = vmatprep.subr.mxu0 0.0
    %931 = vmatpush2.msra.mxu0 0.0
    %932 = vmatprep.subr.mxu0 0.0
    %933 = vmatpush2.msra.mxu0 0.0
    %934 = vmatprep.subr.mxu0 0.0
    %935 = vmatpush2.msra.mxu0 0.0
    %936 = vmatprep.subr.mxu0 0.0
    %937 = vmatpush2.msra.mxu0 0.0
    %938 = vmatprep.subr.mxu0 0.0
    %939 = vmatpush2.msra.mxu0 0.0
    %940 = vmatprep.subr.mxu0 0.0
    %941 = vmatpush2.msra.mxu0 0.0
    %942 = vmatprep.subr.mxu0 0.0
    %943 = vmatpush2.msra.mxu0 0.0
    %944 = vmatprep.subr.mxu0 0.0
    %945 = vmatpush2.msra.mxu0 0.0
    %946 = vmatprep.subr.mxu0 0.0
    %947 = vmatpush2.msra.mxu0 0.0
    %948 = vmatprep.subr.mxu0 0.0
    %949 = vmatpush2.msra.mxu0 0.0
    %950 = vmatprep.mubr.f32.mxu0 0.0
    %951 = vmatmul.mubr.f32.gmra.mxu0 %v884
    %v952 = vpop.f32.mrf.mxu0
    %v953 = vadd.f32 0.0, %v952
    %v954 = vpop.f32.mrf.mxu0
    %955 = vdwg.mxu0
    %v956 = vadd.f32 %v880, %v953
    %v957 = vtanh.pop %v879
    %v958 = vxor.u32 %v879, 2147483648
    %v959 = vmul.f32 %v958, 1.442695
    %v960 = vpow.pop %v959
    %v961 = vadd.f32 %v960, 1.0
    %v962 = vrcp.pop %v961
    %v963 = vmul.f32 1.0, %v962
    %v964 = vsel %vm196, %v957, %v963
    %v965 = vmul.f32 %v964, %v771
    %967 = vrot.lane.b32.xlu0 %v964, 64
    %v968 = vpop.permute.xlu0 %967
    %v970 = vmul.f32 %v964, %v968
    %972 = vrot.lane.b32.xlu0 %v970, 32
    %v973 = vpop.permute.xlu0 %972
    %v975 = vadd.f32 %v965, %v973
    %v976 = vtanh.pop %v975
    %978 = vrot.lane.b32.xlu0 %v976, 64
    %v979 = vpop.permute.xlu0 %978
    %v981 = vmul.f32 %v964, %v979
    %v982 = vtanh.pop %v956
    %v983 = vxor.u32 %v956, 2147483648
    %v984 = vmul.f32 %v983, 1.442695
    %v985 = vpow.pop %v984
    %v986 = vadd.f32 %v985, 1.0
    %v987 = vrcp.pop %v986
    %v988 = vmul.f32 1.0, %v987
    %v989 = vsel %vm196, %v982, %v988
    %v990 = vmul.f32 %v989, %v796
    %992 = vrot.lane.b32.xlu0 %v989, 64
    %v993 = vpop.permute.xlu0 %992
    %v995 = vmul.f32 %v989, %v993
    %997 = vrot.lane.b32.xlu0 %v995, 32
    %v998 = vpop.permute.xlu0 %997
    %v1000 = vadd.f32 %v990, %v998
    %v1001 = vtanh.pop %v1000
    %1003 = vrot.lane.b32.xlu0 %v1001, 64
    %v1004 = vpop.permute.xlu0 %1003
    %v1006 = vmul.f32 %v989, %v1004
    %v1007 = vld [vmem:[#allocation2 + $0x40] sm:$0xff]
    %1009 = vrot.lane.b32.xlu0 %v981, 32
    %v1010 = vpop.permute.xlu0 %1009
    %v1011 = vsel %vm198, %v1010, 0
    %1013 = vmatprep.subr.mxu0 0.0
    %1014 = vmatpush1.msra.mxu0 0.0
    %1015 = vmatprep.subr.mxu0 0.0
    %1016 = vmatpush1.msra.mxu0 0.0
    %1017 = vmatprep.subr.mxu0 0.0
    %1018 = vmatpush1.msra.mxu0 0.0
    %1019 = vmatprep.subr.mxu0 0.0
    %1020 = vmatpush1.msra.mxu0 0.0
    %1021 = vmatprep.subr.mxu0 0.0
    %1022 = vmatpush1.msra.mxu0 0.0
    %1023 = vmatprep.subr.mxu0 0.0
    %1024 = vmatpush1.msra.mxu0 0.0
    %1025 = vmatprep.subr.mxu0 0.0
    %1026 = vmatpush1.msra.mxu0 0.0
    %1027 = vmatprep.subr.mxu0 0.0
    %1028 = vmatpush1.msra.mxu0 0.0
    %1029 = vmatprep.subr.mxu0 0.0
    %1030 = vmatpush1.msra.mxu0 0.0
    %1031 = vmatprep.subr.mxu0 0.0
    %1032 = vmatpush1.msra.mxu0 0.0
    %1033 = vmatprep.subr.mxu0 0.0
    %1034 = vmatpush1.msra.mxu0 0.0
    %1035 = vmatprep.subr.mxu0 0.0
    %1036 = vmatpush1.msra.mxu0 0.0
    %1037 = vmatprep.subr.mxu0 0.0
    %1038 = vmatpush1.msra.mxu0 %v187
    %1039 = vmatprep.subr.mxu0 0.0
    %1040 = vmatpush1.msra.mxu0 %v186
    %1041 = vmatprep.subr.mxu0 0.0
    %1042 = vmatpush1.msra.mxu0 %v185
    %1043 = vmatprep.subr.mxu0 0.0
    %1044 = vmatpush1.msra.mxu0 %v184
    %1045 = vmatprep.subr.mxu0 0.0
    %1046 = vmatpush2.msra.mxu0 0.0
    %1047 = vmatprep.subr.mxu0 0.0
    %1048 = vmatpush2.msra.mxu0 0.0
    %1049 = vmatprep.subr.mxu0 0.0
    %1050 = vmatpush2.msra.mxu0 0.0
    %1051 = vmatprep.subr.mxu0 0.0
    %1052 = vmatpush2.msra.mxu0 0.0
    %1053 = vmatprep.subr.mxu0 0.0
    %1054 = vmatpush2.msra.mxu0 0.0
    %1055 = vmatprep.subr.mxu0 0.0
    %1056 = vmatpush2.msra.mxu0 0.0
    %1057 = vmatprep.subr.mxu0 0.0
    %1058 = vmatpush2.msra.mxu0 0.0
    %1059 = vmatprep.subr.mxu0 0.0
    %1060 = vmatpush2.msra.mxu0 0.0
    %1061 = vmatprep.subr.mxu0 0.0
    %1062 = vmatpush2.msra.mxu0 0.0
    %1063 = vmatprep.subr.mxu0 0.0
    %1064 = vmatpush2.msra.mxu0 0.0
    %1065 = vmatprep.subr.mxu0 0.0
    %1066 = vmatpush2.msra.mxu0 0.0
    %1067 = vmatprep.subr.mxu0 0.0
    %1068 = vmatpush2.msra.mxu0 0.0
    %1069 = vmatprep.subr.mxu0 0.0
    %1070 = vmatpush2.msra.mxu0 0.0
    %1071 = vmatprep.subr.mxu0 0.0
    %1072 = vmatpush2.msra.mxu0 0.0
    %1073 = vmatprep.subr.mxu0 0.0
    %1074 = vmatpush2.msra.mxu0 0.0
    %1075 = vmatprep.subr.mxu0 0.0
    %1076 = vmatpush2.msra.mxu0 0.0
    %1077 = vmatprep.mubr.f32.mxu0 0.0
    %1078 = vmatmul.mubr.f32.gmra.mxu0 %v1011
    %v1079 = vpop.f32.mrf.mxu0
    %v1080 = vadd.f32 0.0, %v1079
    %v1081 = vpop.f32.mrf.mxu0
    %1082 = vdwg.mxu0
    %v1083 = vadd.f32 %v1007, %v1080
    %v1084 = vld [vmem:[#allocation2 + $0x38] sm:$0xff]
    %1086 = vrot.lane.b32.xlu0 %v1006, 32
    %v1087 = vpop.permute.xlu0 %1086
    %v1088 = vsel %vm198, %v1087, 0
    %1090 = vmatprep.subr.mxu0 0.0
    %1091 = vmatpush1.msra.mxu0 0.0
    %1092 = vmatprep.subr.mxu0 0.0
    %1093 = vmatpush1.msra.mxu0 0.0
    %1094 = vmatprep.subr.mxu0 0.0
    %1095 = vmatpush1.msra.mxu0 0.0
    %1096 = vmatprep.subr.mxu0 0.0
    %1097 = vmatpush1.msra.mxu0 0.0
    %1098 = vmatprep.subr.mxu0 0.0
    %1099 = vmatpush1.msra.mxu0 0.0
    %1100 = vmatprep.subr.mxu0 0.0
    %1101 = vmatpush1.msra.mxu0 0.0
    %1102 = vmatprep.subr.mxu0 0.0
    %1103 = vmatpush1.msra.mxu0 0.0
    %1104 = vmatprep.subr.mxu0 0.0
    %1105 = vmatpush1.msra.mxu0 0.0
    %1106 = vmatprep.subr.mxu0 0.0
    %1107 = vmatpush1.msra.mxu0 0.0
    %1108 = vmatprep.subr.mxu0 0.0
    %1109 = vmatpush1.msra.mxu0 0.0
    %1110 = vmatprep.subr.mxu0 0.0
    %1111 = vmatpush1.msra.mxu0 0.0
    %1112 = vmatprep.subr.mxu0 0.0
    %1113 = vmatpush1.msra.mxu0 0.0
    %1114 = vmatprep.subr.mxu0 0.0
    %1115 = vmatpush1.msra.mxu0 %v191
    %1116 = vmatprep.subr.mxu0 0.0
    %1117 = vmatpush1.msra.mxu0 %v190
    %1118 = vmatprep.subr.mxu0 0.0
    %1119 = vmatpush1.msra.mxu0 %v189
    %1120 = vmatprep.subr.mxu0 0.0
    %1121 = vmatpush1.msra.mxu0 %v188
    %1122 = vmatprep.subr.mxu0 0.0
    %1123 = vmatpush2.msra.mxu0 0.0
    %1124 = vmatprep.subr.mxu0 0.0
    %1125 = vmatpush2.msra.mxu0 0.0
    %1126 = vmatprep.subr.mxu0 0.0
    %1127 = vmatpush2.msra.mxu0 0.0
    %1128 = vmatprep.subr.mxu0 0.0
    %1129 = vmatpush2.msra.mxu0 0.0
    %1130 = vmatprep.subr.mxu0 0.0
    %1131 = vmatpush2.msra.mxu0 0.0
    %1132 = vmatprep.subr.mxu0 0.0
    %1133 = vmatpush2.msra.mxu0 0.0
    %1134 = vmatprep.subr.mxu0 0.0
    %1135 = vmatpush2.msra.mxu0 0.0
    %1136 = vmatprep.subr.mxu0 0.0
    %1137 = vmatpush2.msra.mxu0 0.0
    %1138 = vmatprep.subr.mxu0 0.0
    %1139 = vmatpush2.msra.mxu0 0.0
    %1140 = vmatprep.subr.mxu0 0.0
    %1141 = vmatpush2.msra.mxu0 0.0
    %1142 = vmatprep.subr.mxu0 0.0
    %1143 = vmatpush2.msra.mxu0 0.0
    %1144 = vmatprep.subr.mxu0 0.0
    %1145 = vmatpush2.msra.mxu0 0.0
    %1146 = vmatprep.subr.mxu0 0.0
    %1147 = vmatpush2.msra.mxu0 0.0
    %1148 = vmatprep.subr.mxu0 0.0
    %1149 = vmatpush2.msra.mxu0 0.0
    %1150 = vmatprep.subr.mxu0 0.0
    %1151 = vmatpush2.msra.mxu0 0.0
    %1152 = vmatprep.subr.mxu0 0.0
    %1153 = vmatpush2.msra.mxu0 0.0
    %1154 = vmatprep.mubr.f32.mxu0 0.0
    %1155 = vmatmul.mubr.f32.gmra.mxu0 %v1088
    %v1156 = vpop.f32.mrf.mxu0
    %v1157 = vadd.f32 0.0, %v1156
    %v1158 = vpop.f32.mrf.mxu0
    %1159 = vdwg.mxu0
    %v1160 = vadd.f32 %v1084, %v1157
    %v1161 = vtanh.pop %v1083
    %v1162 = vxor.u32 %v1083, 2147483648
    %v1163 = vmul.f32 %v1162, 1.442695
    %v1164 = vpow.pop %v1163
    %v1165 = vadd.f32 %v1164, 1.0
    %v1166 = vrcp.pop %v1165
    %v1167 = vmul.f32 1.0, %v1166
    %v1168 = vsel %vm196, %v1161, %v1167
    %v1169 = vmul.f32 %v1168, %v975
    %1171 = vrot.lane.b32.xlu0 %v1168, 64
    %v1172 = vpop.permute.xlu0 %1171
    %v1174 = vmul.f32 %v1168, %v1172
    %1176 = vrot.lane.b32.xlu0 %v1174, 32
    %v1177 = vpop.permute.xlu0 %1176
    %v1179 = vadd.f32 %v1169, %v1177
    %v1180 = vtanh.pop %v1179
    %1182 = vrot.lane.b32.xlu0 %v1180, 64
    %v1183 = vpop.permute.xlu0 %1182
    %v1185 = vmul.f32 %v1168, %v1183
    %v1186 = vtanh.pop %v1160
    %v1187 = vxor.u32 %v1160, 2147483648
    %v1188 = vmul.f32 %v1187, 1.442695
    %v1189 = vpow.pop %v1188
    %v1190 = vadd.f32 %v1189, 1.0
    %v1191 = vrcp.pop %v1190
    %v1192 = vmul.f32 1.0, %v1191
    %v1193 = vsel %vm196, %v1186, %v1192
    %v1194 = vmul.f32 %v1193, %v1000
    %1196 = vrot.lane.b32.xlu0 %v1193, 64
    %v1197 = vpop.permute.xlu0 %1196
    %v1199 = vmul.f32 %v1193, %v1197
    %1201 = vrot.lane.b32.xlu0 %v1199, 32
    %v1202 = vpop.permute.xlu0 %1201
    %v1204 = vadd.f32 %v1194, %v1202
    %v1205 = vtanh.pop %v1204
    %1207 = vrot.lane.b32.xlu0 %v1205, 64
    %v1208 = vpop.permute.xlu0 %1207
    %v1210 = vmul.f32 %v1193, %v1208
    %v1211 = vld [vmem:[#allocation2 + $0x50] sm:$0xff]
    %1213 = vrot.lane.b32.xlu0 %v1185, 32
    %v1214 = vpop.permute.xlu0 %1213
    %v1215 = vsel %vm198, %v1214, 0
    %1217 = vmatprep.subr.mxu0 0.0
    %1218 = vmatpush1.msra.mxu0 0.0
    %1219 = vmatprep.subr.mxu0 0.0
    %1220 = vmatpush1.msra.mxu0 0.0
    %1221 = vmatprep.subr.mxu0 0.0
    %1222 = vmatpush1.msra.mxu0 0.0
    %1223 = vmatprep.subr.mxu0 0.0
    %1224 = vmatpush1.msra.mxu0 0.0
    %1225 = vmatprep.subr.mxu0 0.0
    %1226 = vmatpush1.msra.mxu0 0.0
    %1227 = vmatprep.subr.mxu0 0.0
    %1228 = vmatpush1.msra.mxu0 0.0
    %1229 = vmatprep.subr.mxu0 0.0
    %1230 = vmatpush1.msra.mxu0 0.0
    %1231 = vmatprep.subr.mxu0 0.0
    %1232 = vmatpush1.msra.mxu0 0.0
    %1233 = vmatprep.subr.mxu0 0.0
    %1234 = vmatpush1.msra.mxu0 0.0
    %1235 = vmatprep.subr.mxu0 0.0
    %1236 = vmatpush1.msra.mxu0 0.0
    %1237 = vmatprep.subr.mxu0 0.0
    %1238 = vmatpush1.msra.mxu0 0.0
    %1239 = vmatprep.subr.mxu0 0.0
    %1240 = vmatpush1.msra.mxu0 0.0
    %1241 = vmatprep.subr.mxu0 0.0
    %1242 = vmatpush1.msra.mxu0 %v187
    %1243 = vmatprep.subr.mxu0 0.0
    %1244 = vmatpush1.msra.mxu0 %v186
    %1245 = vmatprep.subr.mxu0 0.0
    %1246 = vmatpush1.msra.mxu0 %v185
    %1247 = vmatprep.subr.mxu0 0.0
    %1248 = vmatpush1.msra.mxu0 %v184
    %1249 = vmatprep.subr.mxu0 0.0
    %1250 = vmatpush2.msra.mxu0 0.0
    %1251 = vmatprep.subr.mxu0 0.0
    %1252 = vmatpush2.msra.mxu0 0.0
    %1253 = vmatprep.subr.mxu0 0.0
    %1254 = vmatpush2.msra.mxu0 0.0
    %1255 = vmatprep.subr.mxu0 0.0
    %1256 = vmatpush2.msra.mxu0 0.0
    %1257 = vmatprep.subr.mxu0 0.0
    %1258 = vmatpush2.msra.mxu0 0.0
    %1259 = vmatprep.subr.mxu0 0.0
    %1260 = vmatpush2.msra.mxu0 0.0
    %1261 = vmatprep.subr.mxu0 0.0
    %1262 = vmatpush2.msra.mxu0 0.0
    %1263 = vmatprep.subr.mxu0 0.0
    %1264 = vmatpush2.msra.mxu0 0.0
    %1265 = vmatprep.subr.mxu0 0.0
    %1266 = vmatpush2.msra.mxu0 0.0
    %1267 = vmatprep.subr.mxu0 0.0
    %1268 = vmatpush2.msra.mxu0 0.0
    %1269 = vmatprep.subr.mxu0 0.0
    %1270 = vmatpush2.msra.mxu0 0.0
    %1271 = vmatprep.subr.mxu0 0.0
    %1272 = vmatpush2.msra.mxu0 0.0
    %1273 = vmatprep.subr.mxu0 0.0
    %1274 = vmatpush2.msra.mxu0 0.0
    %1275 = vmatprep.subr.mxu0 0.0
    %1276 = vmatpush2.msra.mxu0 0.0
    %1277 = vmatprep.subr.mxu0 0.0
    %1278 = vmatpush2.msra.mxu0 0.0
    %1279 = vmatprep.subr.mxu0 0.0
    %1280 = vmatpush2.msra.mxu0 0.0
    %1281 = vmatprep.mubr.f32.mxu0 0.0
    %1282 = vmatmul.mubr.f32.gmra.mxu0 %v1215
    %v1283 = vpop.f32.mrf.mxu0
    %v1284 = vadd.f32 0.0, %v1283
    %v1285 = vpop.f32.mrf.mxu0
    %1286 = vdwg.mxu0
    %v1287 = vadd.f32 %v1211, %v1284
    %v1288 = vld [vmem:[#allocation2 + $0x28] sm:$0xff]
    %1290 = vrot.lane.b32.xlu0 %v1210, 32
    %v1291 = vpop.permute.xlu0 %1290
    %v1292 = vsel %vm198, %v1291, 0
    %1294 = vmatprep.subr.mxu0 0.0
    %1295 = vmatpush1.msra.mxu0 0.0
    %1296 = vmatprep.subr.mxu0 0.0
    %1297 = vmatpush1.msra.mxu0 0.0
    %1298 = vmatprep.subr.mxu0 0.0
    %1299 = vmatpush1.msra.mxu0 0.0
    %1300 = vmatprep.subr.mxu0 0.0
    %1301 = vmatpush1.msra.mxu0 0.0
    %1302 = vmatprep.subr.mxu0 0.0
    %1303 = vmatpush1.msra.mxu0 0.0
    %1304 = vmatprep.subr.mxu0 0.0
    %1305 = vmatpush1.msra.mxu0 0.0
    %1306 = vmatprep.subr.mxu0 0.0
    %1307 = vmatpush1.msra.mxu0 0.0
    %1308 = vmatprep.subr.mxu0 0.0
    %1309 = vmatpush1.msra.mxu0 0.0
    %1310 = vmatprep.subr.mxu0 0.0
    %1311 = vmatpush1.msra.mxu0 0.0
    %1312 = vmatprep.subr.mxu0 0.0
    %1313 = vmatpush1.msra.mxu0 0.0
    %1314 = vmatprep.subr.mxu0 0.0
    %1315 = vmatpush1.msra.mxu0 0.0
    %1316 = vmatprep.subr.mxu0 0.0
    %1317 = vmatpush1.msra.mxu0 0.0
    %1318 = vmatprep.subr.mxu0 0.0
    %1319 = vmatpush1.msra.mxu0 %v191
    %1320 = vmatprep.subr.mxu0 0.0
    %1321 = vmatpush1.msra.mxu0 %v190
    %1322 = vmatprep.subr.mxu0 0.0
    %1323 = vmatpush1.msra.mxu0 %v189
    %1324 = vmatprep.subr.mxu0 0.0
    %1325 = vmatpush1.msra.mxu0 %v188
    %1326 = vmatprep.subr.mxu0 0.0
    %1327 = vmatpush2.msra.mxu0 0.0
    %1328 = vmatprep.subr.mxu0 0.0
    %1329 = vmatpush2.msra.mxu0 0.0
    %1330 = vmatprep.subr.mxu0 0.0
    %1331 = vmatpush2.msra.mxu0 0.0
    %1332 = vmatprep.subr.mxu0 0.0
    %1333 = vmatpush2.msra.mxu0 0.0
    %1334 = vmatprep.subr.mxu0 0.0
    %1335 = vmatpush2.msra.mxu0 0.0
    %1336 = vmatprep.subr.mxu0 0.0
    %1337 = vmatpush2.msra.mxu0 0.0
    %1338 = vmatprep.subr.mxu0 0.0
    %1339 = vmatpush2.msra.mxu0 0.0
    %1340 = vmatprep.subr.mxu0 0.0
    %1341 = vmatpush2.msra.mxu0 0.0
    %1342 = vmatprep.subr.mxu0 0.0
    %1343 = vmatpush2.msra.mxu0 0.0
    %1344 = vmatprep.subr.mxu0 0.0
    %1345 = vmatpush2.msra.mxu0 0.0
    %1346 = vmatprep.subr.mxu0 0.0
    %1347 = vmatpush2.msra.mxu0 0.0
    %1348 = vmatprep.subr.mxu0 0.0
    %1349 = vmatpush2.msra.mxu0 0.0
    %1350 = vmatprep.subr.mxu0 0.0
    %1351 = vmatpush2.msra.mxu0 0.0
    %1352 = vmatprep.subr.mxu0 0.0
    %1353 = vmatpush2.msra.mxu0 0.0
    %1354 = vmatprep.subr.mxu0 0.0
    %1355 = vmatpush2.msra.mxu0 0.0
    %1356 = vmatprep.subr.mxu0 0.0
    %1357 = vmatpush2.msra.mxu0 0.0
    %1358 = vmatprep.mubr.f32.mxu0 0.0
    %1359 = vmatmul.mubr.f32.gmra.mxu0 %v1292
    %v1360 = vpop.f32.mrf.mxu0
    %v1361 = vadd.f32 0.0, %v1360
    %v1362 = vpop.f32.mrf.mxu0
    %1363 = vdwg.mxu0
    %v1364 = vadd.f32 %v1288, %v1361
    %v1365 = vtanh.pop %v1287
    %v1366 = vxor.u32 %v1287, 2147483648
    %v1367 = vmul.f32 %v1366, 1.442695
    %v1368 = vpow.pop %v1367
    %v1369 = vadd.f32 %v1368, 1.0
    %v1370 = vrcp.pop %v1369
    %v1371 = vmul.f32 1.0, %v1370
    %v1372 = vsel %vm196, %v1365, %v1371
    %v1373 = vmul.f32 %v1372, %v1179
    %1375 = vrot.lane.b32.xlu0 %v1372, 64
    %v1376 = vpop.permute.xlu0 %1375
    %v1378 = vmul.f32 %v1372, %v1376
    %1380 = vrot.lane.b32.xlu0 %v1378, 32
    %v1381 = vpop.permute.xlu0 %1380
    %v1383 = vadd.f32 %v1373, %v1381
    %v1384 = vtanh.pop %v1383
    %1386 = vrot.lane.b32.xlu0 %v1384, 64
    %v1387 = vpop.permute.xlu0 %1386
    %v1389 = vmul.f32 %v1372, %v1387
    %v1390 = vtanh.pop %v1364
    %v1391 = vxor.u32 %v1364, 2147483648
    %v1392 = vmul.f32 %v1391, 1.442695
    %v1393 = vpow.pop %v1392
    %v1394 = vadd.f32 %v1393, 1.0
    %v1395 = vrcp.pop %v1394
    %v1396 = vmul.f32 1.0, %v1395
    %v1397 = vsel %vm196, %v1390, %v1396
    %v1398 = vmul.f32 %v1397, %v1204
    %1400 = vrot.lane.b32.xlu0 %v1397, 64
    %v1401 = vpop.permute.xlu0 %1400
    %v1403 = vmul.f32 %v1397, %v1401
    %1405 = vrot.lane.b32.xlu0 %v1403, 32
    %v1406 = vpop.permute.xlu0 %1405
    %v1408 = vadd.f32 %v1398, %v1406
    %v1409 = vtanh.pop %v1408
    %1411 = vrot.lane.b32.xlu0 %v1409, 64
    %v1412 = vpop.permute.xlu0 %1411
    %v1414 = vmul.f32 %v1397, %v1412
    %v1415 = vld [vmem:[#allocation2 + $0x60] sm:$0xff]
    %1417 = vrot.lane.b32.xlu0 %v1389, 32
    %v1418 = vpop.permute.xlu0 %1417
    %v1419 = vsel %vm198, %v1418, 0
    %1421 = vmatprep.subr.mxu0 0.0
    %1422 = vmatpush1.msra.mxu0 0.0
    %1423 = vmatprep.subr.mxu0 0.0
    %1424 = vmatpush1.msra.mxu0 0.0
    %1425 = vmatprep.subr.mxu0 0.0
    %1426 = vmatpush1.msra.mxu0 0.0
    %1427 = vmatprep.subr.mxu0 0.0
    %1428 = vmatpush1.msra.mxu0 0.0
    %1429 = vmatprep.subr.mxu0 0.0
    %1430 = vmatpush1.msra.mxu0 0.0
    %1431 = vmatprep.subr.mxu0 0.0
    %1432 = vmatpush1.msra.mxu0 0.0
    %1433 = vmatprep.subr.mxu0 0.0
    %1434 = vmatpush1.msra.mxu0 0.0
    %1435 = vmatprep.subr.mxu0 0.0
    %1436 = vmatpush1.msra.mxu0 0.0
    %1437 = vmatprep.subr.mxu0 0.0
    %1438 = vmatpush1.msra.mxu0 0.0
    %1439 = vmatprep.subr.mxu0 0.0
    %1440 = vmatpush1.msra.mxu0 0.0
    %1441 = vmatprep.subr.mxu0 0.0
    %1442 = vmatpush1.msra.mxu0 0.0
    %1443 = vmatprep.subr.mxu0 0.0
    %1444 = vmatpush1.msra.mxu0 0.0
    %1445 = vmatprep.subr.mxu0 0.0
    %1446 = vmatpush1.msra.mxu0 %v187
    %1447 = vmatprep.subr.mxu0 0.0
    %1448 = vmatpush1.msra.mxu0 %v186
    %1449 = vmatprep.subr.mxu0 0.0
    %1450 = vmatpush1.msra.mxu0 %v185
    %1451 = vmatprep.subr.mxu0 0.0
    %1452 = vmatpush1.msra.mxu0 %v184
    %1453 = vmatprep.subr.mxu0 0.0
    %1454 = vmatpush2.msra.mxu0 0.0
    %1455 = vmatprep.subr.mxu0 0.0
    %1456 = vmatpush2.msra.mxu0 0.0
    %1457 = vmatprep.subr.mxu0 0.0
    %1458 = vmatpush2.msra.mxu0 0.0
    %1459 = vmatprep.subr.mxu0 0.0
    %1460 = vmatpush2.msra.mxu0 0.0
    %1461 = vmatprep.subr.mxu0 0.0
    %1462 = vmatpush2.msra.mxu0 0.0
    %1463 = vmatprep.subr.mxu0 0.0
    %1464 = vmatpush2.msra.mxu0 0.0
    %1465 = vmatprep.subr.mxu0 0.0
    %1466 = vmatpush2.msra.mxu0 0.0
    %1467 = vmatprep.subr.mxu0 0.0
    %1468 = vmatpush2.msra.mxu0 0.0
    %1469 = vmatprep.subr.mxu0 0.0
    %1470 = vmatpush2.msra.mxu0 0.0
    %1471 = vmatprep.subr.mxu0 0.0
    %1472 = vmatpush2.msra.mxu0 0.0
    %1473 = vmatprep.subr.mxu0 0.0
    %1474 = vmatpush2.msra.mxu0 0.0
    %1475 = vmatprep.subr.mxu0 0.0
    %1476 = vmatpush2.msra.mxu0 0.0
    %1477 = vmatprep.subr.mxu0 0.0
    %1478 = vmatpush2.msra.mxu0 0.0
    %1479 = vmatprep.subr.mxu0 0.0
    %1480 = vmatpush2.msra.mxu0 0.0
    %1481 = vmatprep.subr.mxu0 0.0
    %1482 = vmatpush2.msra.mxu0 0.0
    %1483 = vmatprep.subr.mxu0 0.0
    %1484 = vmatpush2.msra.mxu0 0.0
    %1485 = vmatprep.mubr.f32.mxu0 0.0
    %1486 = vmatmul.mubr.f32.gmra.mxu0 %v1419
    %v1487 = vpop.f32.mrf.mxu0
    %v1488 = vadd.f32 0.0, %v1487
    %v1489 = vpop.f32.mrf.mxu0
    %1490 = vdwg.mxu0
    %v1491 = vadd.f32 %v1415, %v1488
    %v1492 = vld [vmem:[#allocation2 + $0x18] sm:$0xff]
    %1494 = vrot.lane.b32.xlu0 %v1414, 32
    %v1495 = vpop.permute.xlu0 %1494
    %v1496 = vsel %vm198, %v1495, 0
    %1498 = vmatprep.subr.mxu0 0.0
    %1499 = vmatpush1.msra.mxu0 0.0
    %1500 = vmatprep.subr.mxu0 0.0
    %1501 = vmatpush1.msra.mxu0 0.0
    %1502 = vmatprep.subr.mxu0 0.0
    %1503 = vmatpush1.msra.mxu0 0.0
    %1504 = vmatprep.subr.mxu0 0.0
    %1505 = vmatpush1.msra.mxu0 0.0
    %1506 = vmatprep.subr.mxu0 0.0
    %1507 = vmatpush1.msra.mxu0 0.0
    %1508 = vmatprep.subr.mxu0 0.0
    %1509 = vmatpush1.msra.mxu0 0.0
    %1510 = vmatprep.subr.mxu0 0.0
    %1511 = vmatpush1.msra.mxu0 0.0
    %1512 = vmatprep.subr.mxu0 0.0
    %1513 = vmatpush1.msra.mxu0 0.0
    %1514 = vmatprep.subr.mxu0 0.0
    %1515 = vmatpush1.msra.mxu0 0.0
    %1516 = vmatprep.subr.mxu0 0.0
    %1517 = vmatpush1.msra.mxu0 0.0
    %1518 = vmatprep.subr.mxu0 0.0
    %1519 = vmatpush1.msra.mxu0 0.0
    %1520 = vmatprep.subr.mxu0 0.0
    %1521 = vmatpush1.msra.mxu0 0.0
    %1522 = vmatprep.subr.mxu0 0.0
    %1523 = vmatpush1.msra.mxu0 %v191
    %1524 = vmatprep.subr.mxu0 0.0
    %1525 = vmatpush1.msra.mxu0 %v190
    %1526 = vmatprep.subr.mxu0 0.0
    %1527 = vmatpush1.msra.mxu0 %v189
    %1528 = vmatprep.subr.mxu0 0.0
    %1529 = vmatpush1.msra.mxu0 %v188
    %1530 = vmatprep.subr.mxu0 0.0
    %1531 = vmatpush2.msra.mxu0 0.0
    %1532 = vmatprep.subr.mxu0 0.0
    %1533 = vmatpush2.msra.mxu0 0.0
    %1534 = vmatprep.subr.mxu0 0.0
    %1535 = vmatpush2.msra.mxu0 0.0
    %1536 = vmatprep.subr.mxu0 0.0
    %1537 = vmatpush2.msra.mxu0 0.0
    %1538 = vmatprep.subr.mxu0 0.0
    %1539 = vmatpush2.msra.mxu0 0.0
    %1540 = vmatprep.subr.mxu0 0.0
    %1541 = vmatpush2.msra.mxu0 0.0
    %1542 = vmatprep.subr.mxu0 0.0
    %1543 = vmatpush2.msra.mxu0 0.0
    %1544 = vmatprep.subr.mxu0 0.0
    %1545 = vmatpush2.msra.mxu0 0.0
    %1546 = vmatprep.subr.mxu0 0.0
    %1547 = vmatpush2.msra.mxu0 0.0
    %1548 = vmatprep.subr.mxu0 0.0
    %1549 = vmatpush2.msra.mxu0 0.0
    %1550 = vmatprep.subr.mxu0 0.0
    %1551 = vmatpush2.msra.mxu0 0.0
    %1552 = vmatprep.subr.mxu0 0.0
    %1553 = vmatpush2.msra.mxu0 0.0
    %1554 = vmatprep.subr.mxu0 0.0
    %1555 = vmatpush2.msra.mxu0 0.0
    %1556 = vmatprep.subr.mxu0 0.0
    %1557 = vmatpush2.msra.mxu0 0.0
    %1558 = vmatprep.subr.mxu0 0.0
    %1559 = vmatpush2.msra.mxu0 0.0
    %1560 = vmatprep.subr.mxu0 0.0
    %1561 = vmatpush2.msra.mxu0 0.0
    %1562 = vmatprep.mubr.f32.mxu0 0.0
    %1563 = vmatmul.mubr.f32.gmra.mxu0 %v1496
    %v1564 = vpop.f32.mrf.mxu0
    %v1565 = vadd.f32 0.0, %v1564
    %v1566 = vpop.f32.mrf.mxu0
    %1567 = vdwg.mxu0
    %v1568 = vadd.f32 %v1492, %v1565
    %v1569 = vtanh.pop %v1491
    %v1570 = vxor.u32 %v1491, 2147483648
    %v1571 = vmul.f32 %v1570, 1.442695
    %v1572 = vpow.pop %v1571
    %v1573 = vadd.f32 %v1572, 1.0
    %v1574 = vrcp.pop %v1573
    %v1575 = vmul.f32 1.0, %v1574
    %v1576 = vsel %vm196, %v1569, %v1575
    %v1577 = vmul.f32 %v1576, %v1383
    %1579 = vrot.lane.b32.xlu0 %v1576, 64
    %v1580 = vpop.permute.xlu0 %1579
    %v1582 = vmul.f32 %v1576, %v1580
    %1584 = vrot.lane.b32.xlu0 %v1582, 32
    %v1585 = vpop.permute.xlu0 %1584
    %v1587 = vadd.f32 %v1577, %v1585
    %v1588 = vtanh.pop %v1587
    %1590 = vrot.lane.b32.xlu0 %v1588, 64
    %v1591 = vpop.permute.xlu0 %1590
    %v1593 = vmul.f32 %v1576, %v1591
    %v1594 = vtanh.pop %v1568
    %v1595 = vxor.u32 %v1568, 2147483648
    %v1596 = vmul.f32 %v1595, 1.442695
    %v1597 = vpow.pop %v1596
    %v1598 = vadd.f32 %v1597, 1.0
    %v1599 = vrcp.pop %v1598
    %v1600 = vmul.f32 1.0, %v1599
    %v1601 = vsel %vm196, %v1594, %v1600
    %v1602 = vmul.f32 %v1601, %v1408
    %1604 = vrot.lane.b32.xlu0 %v1601, 64
    %v1605 = vpop.permute.xlu0 %1604
    %v1607 = vmul.f32 %v1601, %v1605
    %1609 = vrot.lane.b32.xlu0 %v1607, 32
    %v1610 = vpop.permute.xlu0 %1609
    %v1612 = vadd.f32 %v1602, %v1610
    %v1613 = vtanh.pop %v1612
    %1615 = vrot.lane.b32.xlu0 %v1613, 64
    %v1616 = vpop.permute.xlu0 %1615
    %v1618 = vmul.f32 %v1601, %v1616
    %v1619 = vld [vmem:[#allocation2 + $0x70] sm:$0xff]
    %1621 = vrot.lane.b32.xlu0 %v1593, 32
    %v1622 = vpop.permute.xlu0 %1621
    %v1623 = vsel %vm198, %v1622, 0
    %1625 = vmatprep.subr.mxu0 0.0
    %1626 = vmatpush1.msra.mxu0 0.0
    %1627 = vmatprep.subr.mxu0 0.0
    %1628 = vmatpush1.msra.mxu0 0.0
    %1629 = vmatprep.subr.mxu0 0.0
    %1630 = vmatpush1.msra.mxu0 0.0
    %1631 = vmatprep.subr.mxu0 0.0
    %1632 = vmatpush1.msra.mxu0 0.0
    %1633 = vmatprep.subr.mxu0 0.0
    %1634 = vmatpush1.msra.mxu0 0.0
    %1635 = vmatprep.subr.mxu0 0.0
    %1636 = vmatpush1.msra.mxu0 0.0
    %1637 = vmatprep.subr.mxu0 0.0
    %1638 = vmatpush1.msra.mxu0 0.0
    %1639 = vmatprep.subr.mxu0 0.0
    %1640 = vmatpush1.msra.mxu0 0.0
    %1641 = vmatprep.subr.mxu0 0.0
    %1642 = vmatpush1.msra.mxu0 0.0
    %1643 = vmatprep.subr.mxu0 0.0
    %1644 = vmatpush1.msra.mxu0 0.0
    %1645 = vmatprep.subr.mxu0 0.0
    %1646 = vmatpush1.msra.mxu0 0.0
    %1647 = vmatprep.subr.mxu0 0.0
    %1648 = vmatpush1.msra.mxu0 0.0
    %1649 = vmatprep.subr.mxu0 0.0
    %1650 = vmatpush1.msra.mxu0 %v187
    %1651 = vmatprep.subr.mxu0 0.0
    %1652 = vmatpush1.msra.mxu0 %v186
    %1653 = vmatprep.subr.mxu0 0.0
    %1654 = vmatpush1.msra.mxu0 %v185
    %1655 = vmatprep.subr.mxu0 0.0
    %1656 = vmatpush1.msra.mxu0 %v184
    %1657 = vmatprep.subr.mxu0 0.0
    %1658 = vmatpush2.msra.mxu0 0.0
    %1659 = vmatprep.subr.mxu0 0.0
    %1660 = vmatpush2.msra.mxu0 0.0
    %1661 = vmatprep.subr.mxu0 0.0
    %1662 = vmatpush2.msra.mxu0 0.0
    %1663 = vmatprep.subr.mxu0 0.0
    %1664 = vmatpush2.msra.mxu0 0.0
    %1665 = vmatprep.subr.mxu0 0.0
    %1666 = vmatpush2.msra.mxu0 0.0
    %1667 = vmatprep.subr.mxu0 0.0
    %1668 = vmatpush2.msra.mxu0 0.0
    %1669 = vmatprep.subr.mxu0 0.0
    %1670 = vmatpush2.msra.mxu0 0.0
    %1671 = vmatprep.subr.mxu0 0.0
    %1672 = vmatpush2.msra.mxu0 0.0
    %1673 = vmatprep.subr.mxu0 0.0
    %1674 = vmatpush2.msra.mxu0 0.0
    %1675 = vmatprep.subr.mxu0 0.0
    %1676 = vmatpush2.msra.mxu0 0.0
    %1677 = vmatprep.subr.mxu0 0.0
    %1678 = vmatpush2.msra.mxu0 0.0
    %1679 = vmatprep.subr.mxu0 0.0
    %1680 = vmatpush2.msra.mxu0 0.0
    %1681 = vmatprep.subr.mxu0 0.0
    %1682 = vmatpush2.msra.mxu0 0.0
    %1683 = vmatprep.subr.mxu0 0.0
    %1684 = vmatpush2.msra.mxu0 0.0
    %1685 = vmatprep.subr.mxu0 0.0
    %1686 = vmatpush2.msra.mxu0 0.0
    %1687 = vmatprep.subr.mxu0 0.0
    %1688 = vmatpush2.msra.mxu0 0.0
    %1689 = vmatprep.mubr.f32.mxu0 0.0
    %1690 = vmatmul.mubr.f32.gmra.mxu0 %v1623
    %v1691 = vpop.f32.mrf.mxu0
    %v1692 = vadd.f32 0.0, %v1691
    %v1693 = vpop.f32.mrf.mxu0
    %1694 = vdwg.mxu0
    %v1695 = vadd.f32 %v1619, %v1692
    %v1696 = vld [vmem:[#allocation2 + $0x8] sm:$0xff]
    %1698 = vrot.lane.b32.xlu0 %v1618, 32
    %v1699 = vpop.permute.xlu0 %1698
    %v1700 = vsel %vm198, %v1699, 0
    %1702 = vmatprep.subr.mxu0 0.0
    %1703 = vmatpush1.msra.mxu0 0.0
    %1704 = vmatprep.subr.mxu0 0.0
    %1705 = vmatpush1.msra.mxu0 0.0
    %1706 = vmatprep.subr.mxu0 0.0
    %1707 = vmatpush1.msra.mxu0 0.0
    %1708 = vmatprep.subr.mxu0 0.0
    %1709 = vmatpush1.msra.mxu0 0.0
    %1710 = vmatprep.subr.mxu0 0.0
    %1711 = vmatpush1.msra.mxu0 0.0
    %1712 = vmatprep.subr.mxu0 0.0
    %1713 = vmatpush1.msra.mxu0 0.0
    %1714 = vmatprep.subr.mxu0 0.0
    %1715 = vmatpush1.msra.mxu0 0.0
    %1716 = vmatprep.subr.mxu0 0.0
    %1717 = vmatpush1.msra.mxu0 0.0
    %1718 = vmatprep.subr.mxu0 0.0
    %1719 = vmatpush1.msra.mxu0 0.0
    %1720 = vmatprep.subr.mxu0 0.0
    %1721 = vmatpush1.msra.mxu0 0.0
    %1722 = vmatprep.subr.mxu0 0.0
    %1723 = vmatpush1.msra.mxu0 0.0
    %1724 = vmatprep.subr.mxu0 0.0
    %1725 = vmatpush1.msra.mxu0 0.0
    %1726 = vmatprep.subr.mxu0 0.0
    %1727 = vmatpush1.msra.mxu0 %v191
    %1728 = vmatprep.subr.mxu0 0.0
    %1729 = vmatpush1.msra.mxu0 %v190
    %1730 = vmatprep.subr.mxu0 0.0
    %1731 = vmatpush1.msra.mxu0 %v189
    %1732 = vmatprep.subr.mxu0 0.0
    %1733 = vmatpush1.msra.mxu0 %v188
    %1734 = vmatprep.subr.mxu0 0.0
    %1735 = vmatpush2.msra.mxu0 0.0
    %1736 = vmatprep.subr.mxu0 0.0
    %1737 = vmatpush2.msra.mxu0 0.0
    %1738 = vmatprep.subr.mxu0 0.0
    %1739 = vmatpush2.msra.mxu0 0.0
    %1740 = vmatprep.subr.mxu0 0.0
    %1741 = vmatpush2.msra.mxu0 0.0
    %1742 = vmatprep.subr.mxu0 0.0
    %1743 = vmatpush2.msra.mxu0 0.0
    %1744 = vmatprep.subr.mxu0 0.0
    %1745 = vmatpush2.msra.mxu0 0.0
    %1746 = vmatprep.subr.mxu0 0.0
    %1747 = vmatpush2.msra.mxu0 0.0
    %1748 = vmatprep.subr.mxu0 0.0
    %1749 = vmatpush2.msra.mxu0 0.0
    %1750 = vmatprep.subr.mxu0 0.0
    %1751 = vmatpush2.msra.mxu0 0.0
    %1752 = vmatprep.subr.mxu0 0.0
    %1753 = vmatpush2.msra.mxu0 0.0
    %1754 = vmatprep.subr.mxu0 0.0
    %1755 = vmatpush2.msra.mxu0 0.0
    %1756 = vmatprep.subr.mxu0 0.0
    %1757 = vmatpush2.msra.mxu0 0.0
    %1758 = vmatprep.subr.mxu0 0.0
    %1759 = vmatpush2.msra.mxu0 0.0
    %1760 = vmatprep.subr.mxu0 0.0
    %1761 = vmatpush2.msra.mxu0 0.0
    %1762 = vmatprep.subr.mxu0 0.0
    %1763 = vmatpush2.msra.mxu0 0.0
    %1764 = vmatprep.subr.mxu0 0.0
    %1765 = vmatpush2.msra.mxu0 0.0
    %1766 = vmatprep.mubr.f32.mxu0 0.0
    %1767 = vmatmul.mubr.f32.gmra.mxu0 %v1700
    %v1768 = vpop.f32.mrf.mxu0
    %v1769 = vadd.f32 0.0, %v1768
    %v1770 = vpop.f32.mrf.mxu0
    %1771 = vdwg.mxu0
    %v1772 = vadd.f32 %v1696, %v1769
    %v1773 = vtanh.pop %v1695
    %v1774 = vxor.u32 %v1695, 2147483648
    %v1775 = vmul.f32 %v1774, 1.442695
    %v1776 = vpow.pop %v1775
    %v1777 = vadd.f32 %v1776, 1.0
    %v1778 = vrcp.pop %v1777
    %v1779 = vmul.f32 1.0, %v1778
    %v1780 = vsel %vm196, %v1773, %v1779
    %v1781 = vmul.f32 %v1780, %v1587
    %1783 = vrot.lane.b32.xlu0 %v1780, 64
    %v1784 = vpop.permute.xlu0 %1783
    %v1786 = vmul.f32 %v1780, %v1784
    %1788 = vrot.lane.b32.xlu0 %v1786, 32
    %v1789 = vpop.permute.xlu0 %1788
    %v1791 = vadd.f32 %v1781, %v1789
    %v1792 = vtanh.pop %v1791
    %1794 = vrot.lane.b32.xlu0 %v1792, 64
    %v1795 = vpop.permute.xlu0 %1794
    %v1797 = vmul.f32 %v1780, %v1795
    %v1798 = vtanh.pop %v1772
    %v1799 = vxor.u32 %v1772, 2147483648
    %v1800 = vmul.f32 %v1799, 1.442695
    %v1801 = vpow.pop %v1800
    %v1802 = vadd.f32 %v1801, 1.0
    %v1803 = vrcp.pop %v1802
    %v1804 = vmul.f32 1.0, %v1803
    %v1805 = vsel %vm196, %v1798, %v1804
    %v1806 = vmul.f32 %v1805, %v1612
    %1808 = vrot.lane.b32.xlu0 %v1805, 64
    %v1809 = vpop.permute.xlu0 %1808
    %v1811 = vmul.f32 %v1805, %v1809
    %1813 = vrot.lane.b32.xlu0 %v1811, 32
    %v1814 = vpop.permute.xlu0 %1813
    %v1816 = vadd.f32 %v1806, %v1814
    %v1817 = vtanh.pop %v1816
    %1819 = vrot.lane.b32.xlu0 %v1817, 64
    %v1820 = vpop.permute.xlu0 %1819
    %v1822 = vmul.f32 %v1805, %v1820
    %v1823 = vld [vmem:[%s4] sm:$0x1]
    %1826 = vrot.lane.b32.xlu0 %v1822, 64
    %v1827 = vpop.permute.xlu0 %1826
    %v1829 = vsel %vm198, %v398, %v1827
    %1831 = vrot.lane.b32.xlu0 %v1618, 64
    %v1832 = vpop.permute.xlu0 %1831
    %v1834 = vsel %vm198, %v602, %v1832
    %1836 = vrot.lane.b32.xlu0 %v1414, 64
    %v1837 = vpop.permute.xlu0 %1836
    %v1839 = vsel %vm198, %v806, %v1837
    %1841 = vrot.lane.b32.xlu0 %v1210, 64
    %v1842 = vpop.permute.xlu0 %1841
    %v1844 = vsel %vm198, %v1010, %v1842
    %1846 = vrot.lane.b32.xlu0 %v1006, 64
    %v1847 = vpop.permute.xlu0 %1846
    %v1849 = vsel %vm198, %v1214, %v1847
    %1851 = vrot.lane.b32.xlu0 %v802, 64
    %v1852 = vpop.permute.xlu0 %1851
    %v1854 = vsel %vm198, %v1418, %v1852
    %1856 = vrot.lane.b32.xlu0 %v598, 64
    %v1857 = vpop.permute.xlu0 %1856
    %v1859 = vsel %vm198, %v1622, %v1857
    %1861 = vrot.lane.b32.xlu0 %v1797, 32
    %v1862 = vpop.permute.xlu0 %1861
    %1864 = vrot.lane.b32.xlu0 %v394, 64
    %v1865 = vpop.permute.xlu0 %1864
    %v1867 = vsel %vm198, %v1862, %v1865
    %v1869 = vlaneseq
    %v1870 = vshrl.u32 %v1869, 7
    %v1871 = vsub.s32 0, %v1870
    %v1872 = vrot.slane %v1823, %v1871
    %v1874 = vmul.f32 %v1829, %v1872
    %vm1875 = vcmask 523264
    %v1876 = vsel %vm1875, %v1874, 0.0
    %1877 = vadd.xlane.f32.xlu0 %v1876
    %v1878 = vpop.xlane.xlu0 %1877
    %v1879 = vmul.f32 %v1834, %v1872
    %v1880 = vsel %vm1875, %v1879, 0.0
    %1881 = vadd.xlane.f32.xlu0 %v1880
    %v1882 = vpop.xlane.xlu0 %1881
    %v1883 = vmul.f32 %v1839, %v1872
    %v1884 = vsel %vm1875, %v1883, 0.0
    %1885 = vadd.xlane.f32.xlu0 %v1884
    %v1886 = vpop.xlane.xlu0 %1885
    %v1887 = vmul.f32 %v1844, %v1872
    %v1888 = vsel %vm1875, %v1887, 0.0
    %1889 = vadd.xlane.f32.xlu0 %v1888
    %v1890 = vpop.xlane.xlu0 %1889
    %v1891 = vmul.f32 %v1849, %v1872
    %v1892 = vsel %vm1875, %v1891, 0.0
    %1893 = vadd.xlane.f32.xlu0 %v1892
    %v1894 = vpop.xlane.xlu0 %1893
    %v1895 = vmul.f32 %v1854, %v1872
    %v1896 = vsel %vm1875, %v1895, 0.0
    %1897 = vadd.xlane.f32.xlu0 %v1896
    %v1898 = vpop.xlane.xlu0 %1897
    %v1899 = vmul.f32 %v1859, %v1872
    %v1900 = vsel %vm1875, %v1899, 0.0
    %1901 = vadd.xlane.f32.xlu0 %v1900
    %v1902 = vpop.xlane.xlu0 %1901
    %v1903 = vmul.f32 %v1867, %v1872
    %v1904 = vsel %vm1875, %v1903, 0.0
    %1905 = vadd.xlane.f32.xlu0 %v1904
    %v1906 = vpop.xlane.xlu0 %1905
    %v1907 = vmax.f32 %v1878, %v1882
    %v1908 = vmax.f32 %v1907, %v1886
    %v1909 = vmax.f32 %v1908, %v1890
    %v1910 = vmax.f32 %v1909, %v1894
    %v1911 = vmax.f32 %v1910, %v1898
    %v1912 = vmax.f32 %v1911, %v1902
    %v1913 = vmax.f32 %v1912, %v1906
    %v1914 = vsub.f32 %v1878, %v1913
    %v1915 = vmul.f32 %v1914, 1.442695
    %v1916 = vpow.pop %v1915
    %v1917 = vsub.f32 %v1882, %v1913
    %v1918 = vmul.f32 %v1917, 1.442695
    %v1919 = vpow.pop %v1918
    %v1920 = vsub.f32 %v1886, %v1913
    %v1921 = vmul.f32 %v1920, 1.442695
    %v1922 = vpow.pop %v1921
    %v1923 = vsub.f32 %v1890, %v1913
    %v1924 = vmul.f32 %v1923, 1.442695
    %v1925 = vpow.pop %v1924
    %v1926 = vsub.f32 %v1894, %v1913
    %v1927 = vmul.f32 %v1926, 1.442695
    %v1928 = vpow.pop %v1927
    %v1929 = vsub.f32 %v1898, %v1913
    %v1930 = vmul.f32 %v1929, 1.442695
    %v1931 = vpow.pop %v1930
    %v1932 = vsub.f32 %v1902, %v1913
    %v1933 = vmul.f32 %v1932, 1.442695
    %v1934 = vpow.pop %v1933
    %v1935 = vsub.f32 %v1906, %v1913
    %v1936 = vmul.f32 %v1935, 1.442695
    %v1937 = vpow.pop %v1936
    %v1938 = vadd.f32 %v1916, %v1919
    %v1939 = vadd.f32 %v1938, %v1922
    %v1940 = vadd.f32 %v1939, %v1925
    %v1941 = vadd.f32 %v1940, %v1928
    %v1942 = vadd.f32 %v1941, %v1931
    %v1943 = vadd.f32 %v1942, %v1934
    %v1944 = vadd.f32 %v1943, %v1937
    %v1945 = vmul.f32 %v1916, %v1829
    %v1946 = vmul.f32 %v1919, %v1834
    %v1947 = vadd.f32 %v1945, %v1946
    %v1948 = vmul.f32 %v1922, %v1839
    %v1949 = vadd.f32 %v1947, %v1948
    %v1950 = vmul.f32 %v1925, %v1844
    %v1951 = vadd.f32 %v1949, %v1950
    %v1952 = vmul.f32 %v1928, %v1849
    %v1953 = vadd.f32 %v1951, %v1952
    %v1954 = vmul.f32 %v1931, %v1854
    %v1955 = vadd.f32 %v1953, %v1954
    %v1956 = vmul.f32 %v1934, %v1859
    %v1957 = vadd.f32 %v1955, %v1956
    %v1958 = vmul.f32 %v1937, %v1867
    %v1959 = vadd.f32 %v1957, %v1958
    %v1960 = vrcp.pop %v1944
    %v1961 = vmul.f32 %v1959, %v1960
    %v1962 = vld [vmem:[%s5] sm:$0xff]
    %v1963 = vld [vmem:[%s5 + $0x8] sm:$0xff]
    %v1964 = vld [vmem:[%s5 + $0x10] sm:$0xff]
    %v1965 = vld [vmem:[%s5 + $0x18] sm:$0xff]
    %v1966 = vld [vmem:[%s5 + $0x20] sm:$0xff]
    %v1967 = vld [vmem:[%s5 + $0x28] sm:$0xff]
    %v1968 = vld [vmem:[%s5 + $0x30] sm:$0xff]
    %v1969 = vld [vmem:[%s5 + $0x38] sm:$0xff]
    %v1970 = vld [vmem:[%s6] sm:$0x1]
    %v1972 = vlaneseq
    %v1973 = vshrl.u32 %v1972, 7
    %v1974 = vsub.s32 0, %v1973
    %v1975 = vrot.slane %v1970, %v1974
    %v1978 = vsel %vm1875, %v1961, 0
    %1980 = vmatprep.subr.mxu0 0.0
    %1981 = vmatpush1.msra.mxu0 0.0
    %1982 = vmatprep.subr.mxu0 0.0
    %1983 = vmatpush1.msra.mxu0 0.0
    %1984 = vmatprep.subr.mxu0 0.0
    %1985 = vmatpush1.msra.mxu0 0.0
    %1986 = vmatprep.subr.mxu0 0.0
    %1987 = vmatpush1.msra.mxu0 0.0
    %1988 = vmatprep.subr.mxu0 0.0
    %1989 = vmatpush1.msra.mxu0 0.0
    %1990 = vmatprep.subr.mxu0 0.0
    %1991 = vmatpush1.msra.mxu0 0.0
    %1992 = vmatprep.subr.mxu0 0.0
    %1993 = vmatpush1.msra.mxu0 0.0
    %1994 = vmatprep.subr.mxu0 0.0
    %1995 = vmatpush1.msra.mxu0 0.0
    %1996 = vmatprep.subr.mxu0 0.0
    %1997 = vmatpush1.msra.mxu0 %v1969
    %1998 = vmatprep.subr.mxu0 0.0
    %1999 = vmatpush1.msra.mxu0 %v1968
    %2000 = vmatprep.subr.mxu0 0.0
    %2001 = vmatpush1.msra.mxu0 %v1967
    %2002 = vmatprep.subr.mxu0 0.0
    %2003 = vmatpush1.msra.mxu0 %v1966
    %2004 = vmatprep.subr.mxu0 0.0
    %2005 = vmatpush1.msra.mxu0 %v1965
    %2006 = vmatprep.subr.mxu0 0.0
    %2007 = vmatpush1.msra.mxu0 %v1964
    %2008 = vmatprep.subr.mxu0 0.0
    %2009 = vmatpush1.msra.mxu0 %v1963
    %2010 = vmatprep.subr.mxu0 0.0
    %2011 = vmatpush1.msra.mxu0 %v1962
    %2012 = vmatprep.subr.mxu0 0.0
    %2013 = vmatpush2.msra.mxu0 0.0
    %2014 = vmatprep.subr.mxu0 0.0
    %2015 = vmatpush2.msra.mxu0 0.0
    %2016 = vmatprep.subr.mxu0 0.0
    %2017 = vmatpush2.msra.mxu0 0.0
    %2018 = vmatprep.subr.mxu0 0.0
    %2019 = vmatpush2.msra.mxu0 0.0
    %2020 = vmatprep.subr.mxu0 0.0
    %2021 = vmatpush2.msra.mxu0 0.0
    %2022 = vmatprep.subr.mxu0 0.0
    %2023 = vmatpush2.msra.mxu0 0.0
    %2024 = vmatprep.subr.mxu0 0.0
    %2025 = vmatpush2.msra.mxu0 0.0
    %2026 = vmatprep.subr.mxu0 0.0
    %2027 = vmatpush2.msra.mxu0 0.0
    %2028 = vmatprep.subr.mxu0 0.0
    %2029 = vmatpush2.msra.mxu0 0.0
    %2030 = vmatprep.subr.mxu0 0.0
    %2031 = vmatpush2.msra.mxu0 0.0
    %2032 = vmatprep.subr.mxu0 0.0
    %2033 = vmatpush2.msra.mxu0 0.0
    %2034 = vmatprep.subr.mxu0 0.0
    %2035 = vmatpush2.msra.mxu0 0.0
    %2036 = vmatprep.subr.mxu0 0.0
    %2037 = vmatpush2.msra.mxu0 0.0
    %2038 = vmatprep.subr.mxu0 0.0
    %2039 = vmatpush2.msra.mxu0 0.0
    %2040 = vmatprep.subr.mxu0 0.0
    %2041 = vmatpush2.msra.mxu0 0.0
    %2042 = vmatprep.subr.mxu0 0.0
    %2043 = vmatpush2.msra.mxu0 0.0
    %2044 = vmatprep.mubr.f32.mxu0 0.0
    %2045 = vmatmul.mubr.f32.gmra.mxu0 %v1978
    %v2046 = vpop.f32.mrf.mxu0
    %v2047 = vadd.f32 %v1975, %v2046
    %v2048 = vpop.f32.mrf.mxu0
    %2049 = vdwg.mxu0
    %vm2050 = vcmask 31744
    %2051 = vst.msk [vmem:[%s7] sm:$0xff] %vm2050, %v2047
    // Predicated region
    $region38: #{bilstm_attention_forward.1} parent=1 // pred_check
      _
    $region39: #{bilstm_attention_forward.1} parent=1 // pred_check_branch
      %2053 = sbr.rel (0) target = $region41
    $region40: #{bilstm_attention_forward.1} parent=1 // pred_region
      _
    $region41: #{bilstm_attention_forward.1} parent=1 // pred_fallthru
      _
    // Predicated region
    $region42: #{bilstm_attention_forward.1} parent=1 // pred_check
      _
    $region43: #{bilstm_attention_forward.1} parent=1 // pred_check_branch
      %2055 = sbr.rel (0) target = $region45
    $region44: #{bilstm_attention_forward.1} parent=1 // pred_region
      _
    $region45: #{bilstm_attention_forward.1} parent=1 // pred_fallthru
      _
    %2056 = vsyncpa [#allocation4], 1
    %2057 = vsyncpa [#allocation5], 1

</llo_original>
